<compile_context>
chip_gen: v7x
topology: tpu7x:2x2x1
jax: 0.10.0
libtpu: 0.0.40
codegen_flags: <defaults>
</compile_context>

<pallas_src>
import functools
import math

import jax
import jax.numpy as jnp
from jax.experimental import pallas as pl
from jax.experimental.pallas import tpu as pltpu


def gat_kernel(h_ref, dis_ref, bias_ref, wg_ref, a12_ref, we3_ref, out_ref, *,
               N, TI, nb_heads, n_hidden, slope):
    D = nb_heads * n_hidden

    # ---- node projection (MXU), needed for logits and aggregation ----
    h2d = h_ref[0]                                                          # (N, H)
    g = jnp.dot(h2d, wg_ref[...], preferred_element_type=jnp.float32)       # (N, D)

    # ---- fused i/j logit terms: one matmul against [a1 | a2] ----
    s12 = jnp.dot(g, a12_ref[...], preferred_element_type=jnp.float32)      # (N, 2*heads)
    s12t = s12.T                                                            # (2*heads, N) tiny
    s1t = s12t[:nb_heads]                                                   # (heads, N)  i-dep
    s2t = s12t[nb_heads:]                                                   # (heads, N)  j-dep
    if TI == N:
        s1t_tile = s1t                                                      # (heads, TI)
    else:
        i0 = pl.multiple_of(pl.program_id(1) * TI, TI)
        s1t_tile = jax.lax.dynamic_slice_in_dim(s1t, i0, TI, axis=1)        # (heads, TI)

    # ---- edge logit term: a3 folded into the edge projection (we3 = we@a3) ----
    dis2d = dis_ref[0]                                                      # (TI*N, H)
    s3 = jnp.dot(dis2d, we3_ref[...], preferred_element_type=jnp.float32)   # (TI*N, heads)
    s3t = jnp.transpose(s3.reshape(TI, N, nb_heads), (2, 0, 1))             # (heads, TI, N)

    # ---- logits, head-major with j on lanes; pure broadcast adds ----
    e = s1t_tile[:, :, None] + s2t[:, None, :] + s3t                        # (heads, TI, N)
    e = jnp.where(e > 0, e, slope * e)                                      # LeakyReLU
    e = e + bias_ref[0][None]                                               # additive adjacency mask

    # ---- softmax over j (last / lane axis); exact divide ----
    m = jnp.max(e, axis=-1, keepdims=True)
    p = jnp.exp(e - m)
    a = p / jnp.sum(p, axis=-1, keepdims=True)                              # (heads, TI, N)

    # ---- per-head batched aggregation: a @ g_head ----
    g_h = jnp.transpose(g.reshape(N, nb_heads, n_hidden), (1, 0, 2))        # (heads, N, nh)
    out_h = jnp.einsum('hij,hjf->hif', a, g_h,
                       preferred_element_type=jnp.float32)                  # (heads, TI, nh)
    out = jnp.transpose(out_h, (1, 0, 2)).reshape(TI, D)                    # (TI, D)
    out_ref[0] = out.astype(out_ref.dtype)                                  # single dense store


def gat_forward(h, dis_flat, adj, wg, we, attn_w, *,
                nb_heads, n_hidden, slope=0.2, row_tile=None):
    B, N, H = h.shape
    D = nb_heads * n_hidden
    TI = N if row_tile is None else row_tile
    assert N % TI == 0

    aw1 = attn_w[:n_hidden]
    aw2 = attn_w[n_hidden:2 * n_hidden]
    aw3 = attn_w[2 * n_hidden:]

    # Block-diagonal attn weights for the i/j terms, fused side by side: (D, 2*heads).
    eye = jnp.eye(nb_heads, dtype=jnp.float32)
    a1 = jnp.kron(eye, aw1.reshape(n_hidden, 1))                            # (D, heads)
    a2 = jnp.kron(eye, aw2.reshape(n_hidden, 1))                            # (D, heads)
    a12 = jnp.concatenate([a1, a2], axis=1)                                 # (D, 2*heads)

    # Fold a3 into the edge projection: we3[c, hd] = sum_f we[c, hd*nh+f] * aw3[f].
    we3 = jnp.einsum('chf,f->ch', we.reshape(H, nb_heads, n_hidden), aw3)   # (H, heads)

    # Additive adjacency bias (finite large-negative -> no NaNs for empty rows).
    adj_bias = jnp.where(adj == 0.0, jnp.float32(-1e30), jnp.float32(0.0))  # (B, N, N)

    kernel = functools.partial(gat_kernel, N=N, TI=TI, nb_heads=nb_heads,
                               n_hidden=n_hidden, slope=slope)
    return pl.pallas_call(
        kernel,
        out_shape=jax.ShapeDtypeStruct((B, N, D), jnp.float32),
        grid=(B, N // TI),
        in_specs=[
            pl.BlockSpec((1, N, H), lambda b, it: (b, 0, 0)),               # h (all nodes)
            pl.BlockSpec((1, TI * N, H), lambda b, it: (b, it, 0)),         # dis: i-row tile
            pl.BlockSpec((1, TI, N), lambda b, it: (b, it, 0)),             # adjacency bias
            pl.BlockSpec((H, D), lambda b, it: (0, 0)),                     # wg
            pl.BlockSpec((D, 2 * nb_heads), lambda b, it: (0, 0)),          # [a1 | a2]
            pl.BlockSpec((H, nb_heads), lambda b, it: (0, 0)),              # we3 = we @ a3
        ],
        out_specs=pl.BlockSpec((1, TI, D), lambda b, it: (b, it, 0)),
        compiler_params=pltpu.CompilerParams(
            dimension_semantics=("parallel", "parallel")),
    )(h, dis_flat, adj_bias, wg, a12, we3)


def gat_reference(h, dis_flat, adj, wg, we, attn_w, nb_heads, n_hidden, slope):
    """Pure-JAX mirror of the PyTorch forward (for verification)."""
    B, N, H = h.shape
    g = (h @ wg).reshape(B, N, nb_heads, n_hidden)
    g_repeat = jnp.tile(g, (1, N, 1, 1))                 # g[j] at pair k=i*N+j
    g_repeat_interleave = jnp.repeat(g, N, axis=1)       # g[i] at pair k=i*N+j
    de = (dis_flat @ we).reshape(B, N * N, nb_heads, n_hidden)
    g_concat = jnp.concatenate([g_repeat_interleave, g_repeat, de], axis=-1)
    g_concat = g_concat.reshape(B, N, N, nb_heads, 3 * n_hidden)
    e = jnp.einsum('bijhk,k->bijh', g_concat, attn_w)
    e = jnp.where(e > 0, e, slope * e)                   # LeakyReLU
    e = jnp.where(adj[..., None] == 0, -jnp.inf, e)
    a = jax.nn.softmax(e, axis=2)
    res = jnp.einsum('bijh,bjhf->bihf', a, g)
    return res.reshape(B, N, nb_heads * n_hidden)


if __name__ == "__main__":
    B = 2
    N = 8                 # nb_node
    hidden_dim = 32
    nb_heads = 4
    n_hidden = hidden_dim // nb_heads
    D = nb_heads * n_hidden
    slope = 0.2

    key = jax.random.PRNGKey(0)
    k1, k2, k3, k4, k5, k6 = jax.random.split(key, 6)

    h = jax.random.normal(k1, (B, N, hidden_dim), dtype=jnp.float32)
    dis_flat = jax.random.normal(k2, (B, N * N, hidden_dim), dtype=jnp.float32)
    adj = (jax.random.uniform(k3, (B, N, N)) > 0.3).astype(jnp.float32)
    adj = jnp.maximum(adj, jnp.eye(N, dtype=jnp.float32)[None])  # self-loops (no empty rows)

    # Deterministic parameter init (linear.weight.T layouts).
    wg = jax.random.normal(k4, (hidden_dim, D), dtype=jnp.float32) / math.sqrt(hidden_dim)
    we = jax.random.normal(k5, (hidden_dim, D), dtype=jnp.float32) / math.sqrt(hidden_dim)
    attn_w = jax.random.normal(k6, (3 * n_hidden,), dtype=jnp.float32) / math.sqrt(3 * n_hidden)

    out = gat_forward(h, dis_flat, adj, wg, we, attn_w,
                      nb_heads=nb_heads, n_hidden=n_hidden, slope=slope)
    out = jax.block_until_ready(out)

    ref = gat_reference(h, dis_flat, adj, wg, we, attn_w, nb_heads, n_hidden, slope)
    assert out.shape == (B, N, D), out.shape
    assert jnp.allclose(out, ref, atol=1e-3, rtol=1e-3), float(jnp.max(jnp.abs(out - ref)))

    print("KERNEL_OK")
</pallas_src>

<mosaic_0001>
module attributes {stable_mosaic.version = 11 : i64} {
  func.func @gat_kernel(%arg0: i32, %arg1: i32, %arg2: memref<1x8x32xf32, #tpu.memory_space<vmem>>, %arg3: memref<1x64x32xf32, #tpu.memory_space<vmem>>, %arg4: memref<1x8x8xf32, #tpu.memory_space<vmem>>, %arg5: memref<32x32xf32, #tpu.memory_space<vmem>>, %arg6: memref<32x8xf32, #tpu.memory_space<vmem>>, %arg7: memref<32x4xf32, #tpu.memory_space<vmem>>, %arg8: memref<1x8x32xf32, #tpu.memory_space<vmem>>) attributes {dimension_semantics = [#tpu.dimension_semantics<parallel>, #tpu.dimension_semantics<parallel>], iteration_bounds = array<i64: 2, 1>, scalar_prefetch = 0 : i64, scratch_operands = 0 : i64, tpu.core_type = #tpu.core_type<tc>, window_params = [{transform_indices = @transform_0, window_bounds = array<i64: 1, 8, 32>}, {transform_indices = @transform_1, window_bounds = array<i64: 1, 64, 32>}, {transform_indices = @transform_2, window_bounds = array<i64: 1, 8, 8>}, {pipeline_mode = #tpu.pipeline_mode<synchronous>, transform_indices = @transform_3, window_bounds = array<i64: 32, 32>}, {pipeline_mode = #tpu.pipeline_mode<synchronous>, transform_indices = @transform_4, window_bounds = array<i64: 32, 8>}, {pipeline_mode = #tpu.pipeline_mode<synchronous>, transform_indices = @transform_5, window_bounds = array<i64: 32, 4>}, {transform_indices = @transform_6, window_bounds = array<i64: 1, 8, 32>}]} {
    %c0 = arith.constant 0 : index
    %c0_0 = arith.constant 0 : index
    %c0_1 = arith.constant 0 : index
    %0 = vector.load %arg2[%c0, %c0_0, %c0_1] : memref<1x8x32xf32, #tpu.memory_space<vmem>>, vector<1x8x32xf32>
    %1 = vector.shape_cast %0 : vector<1x8x32xf32> to vector<8x32xf32>
    %c0_2 = arith.constant 0 : index
    %c0_3 = arith.constant 0 : index
    %2 = vector.load %arg5[%c0_2, %c0_3] : memref<32x32xf32, #tpu.memory_space<vmem>>, vector<32x32xf32>
    %cst = arith.constant dense<0.000000e+00> : vector<8x32xf32>
    %3 = tpu.matmul %1, %2, %cst {dimension_numbers = #tpu.dot_dimension_numbers<[1], [0], [0], [1], [0, 0, 1, 1], [], []>} : vector<8x32xf32>, vector<32x32xf32>, vector<8x32xf32> -> vector<8x32xf32>
    %c0_4 = arith.constant 0 : index
    %c0_5 = arith.constant 0 : index
    %4 = vector.load %arg6[%c0_4, %c0_5] : memref<32x8xf32, #tpu.memory_space<vmem>>, vector<32x8xf32>
    %cst_6 = arith.constant dense<0.000000e+00> : vector<8x8xf32>
    %5 = tpu.matmul %3, %4, %cst_6 {dimension_numbers = #tpu.dot_dimension_numbers<[1], [0], [0], [1], [0, 0, 1, 1], [], []>} : vector<8x32xf32>, vector<32x8xf32>, vector<8x8xf32> -> vector<8x8xf32>
    %6 = tpu.transpose %5, [1, 0] : vector<8x8xf32> -> vector<8x8xf32>
    %7 = vector.extract_strided_slice %6 {offsets = [0, 0], sizes = [4, 8], strides = [1, 1]} : vector<8x8xf32> to vector<4x8xf32>
    %8 = vector.extract_strided_slice %6 {offsets = [4, 0], sizes = [4, 8], strides = [1, 1]} : vector<8x8xf32> to vector<4x8xf32>
    %c0_7 = arith.constant 0 : index
    %c0_8 = arith.constant 0 : index
    %c0_9 = arith.constant 0 : index
    %9 = vector.load %arg3[%c0_7, %c0_8, %c0_9] : memref<1x64x32xf32, #tpu.memory_space<vmem>>, vector<1x64x32xf32>
    %10 = vector.shape_cast %9 : vector<1x64x32xf32> to vector<64x32xf32>
    %c0_10 = arith.constant 0 : index
    %c0_11 = arith.constant 0 : index
    %11 = vector.load %arg7[%c0_10, %c0_11] : memref<32x4xf32, #tpu.memory_space<vmem>>, vector<32x4xf32>
    %cst_12 = arith.constant dense<0.000000e+00> : vector<64x4xf32>
    %12 = tpu.matmul %10, %11, %cst_12 {dimension_numbers = #tpu.dot_dimension_numbers<[1], [0], [0], [1], [0, 0, 1, 1], [], []>} : vector<64x32xf32>, vector<32x4xf32>, vector<64x4xf32> -> vector<64x4xf32>
    %13 = vector.shape_cast %12 : vector<64x4xf32> to vector<8x8x4xf32>
    %14 = tpu.transpose %13, [2, 0, 1] : vector<8x8x4xf32> -> vector<4x8x8xf32>
    %15 = vector.shape_cast %7 : vector<4x8xf32> to vector<4x8x1xf32>
    %16 = vector.shape_cast %8 : vector<4x8xf32> to vector<4x1x8xf32>
    %17 = vector.broadcast %15 : vector<4x8x1xf32> to vector<4x8x8xf32>
    %18 = vector.broadcast %16 : vector<4x1x8xf32> to vector<4x8x8xf32>
    %19 = arith.addf %17, %18 : vector<4x8x8xf32>
    %20 = arith.addf %19, %14 : vector<4x8x8xf32>
    %cst_13 = arith.constant 0.000000e+00 : f32
    %21 = vector.broadcast %cst_13 : f32 to vector<4x8x8xf32>
    %22 = arith.cmpf ogt, %20, %21 : vector<4x8x8xf32>
    %cst_14 = arith.constant 2.000000e-01 : f32
    %23 = vector.broadcast %cst_14 : f32 to vector<4x8x8xf32>
    %24 = arith.mulf %23, %20 : vector<4x8x8xf32>
    %25 = arith.select %22, %20, %24 : vector<4x8x8xi1>, vector<4x8x8xf32>
    %c0_15 = arith.constant 0 : index
    %c0_16 = arith.constant 0 : index
    %c0_17 = arith.constant 0 : index
    %26 = vector.load %arg4[%c0_15, %c0_16, %c0_17] : memref<1x8x8xf32, #tpu.memory_space<vmem>>, vector<1x8x8xf32>
    %27 = vector.shape_cast %26 : vector<1x8x8xf32> to vector<8x8xf32>
    %28 = vector.shape_cast %27 : vector<8x8xf32> to vector<1x8x8xf32>
    %29 = vector.broadcast %28 : vector<1x8x8xf32> to vector<4x8x8xf32>
    %30 = arith.addf %25, %29 : vector<4x8x8xf32>
    %cst_18 = arith.constant dense<0xFF800000> : vector<4x8xf32>
    %31 = vector.multi_reduction <maximumf>, %30, %cst_18 [2] : vector<4x8x8xf32> to vector<4x8xf32>
    %32 = vector.shape_cast %31 : vector<4x8xf32> to vector<4x8x1xf32>
    %33 = vector.broadcast %32 : vector<4x8x1xf32> to vector<4x8x8xf32>
    %34 = arith.subf %30, %33 : vector<4x8x8xf32>
    %35 = math.exp %34 : vector<4x8x8xf32>
    %cst_19 = arith.constant dense<0.000000e+00> : vector<4x8xf32>
    %36 = vector.multi_reduction <add>, %35, %cst_19 [2] : vector<4x8x8xf32> to vector<4x8xf32>
    %37 = vector.shape_cast %36 : vector<4x8xf32> to vector<4x8x1xf32>
    %38 = vector.broadcast %37 : vector<4x8x1xf32> to vector<4x8x8xf32>
    %39 = arith.divf %35, %38 : vector<4x8x8xf32>
    %40 = vector.shape_cast %3 : vector<8x32xf32> to vector<8x4x8xf32>
    %41 = tpu.transpose %40, [1, 0, 2] : vector<8x4x8xf32> -> vector<4x8x8xf32>
    "tpu.trace_start"() <{level = 10 : i32, message = "hij,hjf->hif"}> : () -> ()
    %cst_20 = arith.constant dense<0.000000e+00> : vector<4x8x8xf32>
    %42 = tpu.matmul %39, %41, %cst_20 {dimension_numbers = #tpu.dot_dimension_numbers<[2], [1], [1], [2], [0, 0, 0, 1, 1, 2], [0], [0]>} : vector<4x8x8xf32>, vector<4x8x8xf32>, vector<4x8x8xf32> -> vector<4x8x8xf32>
    "tpu.trace_stop"() : () -> ()
    %43 = tpu.transpose %42, [1, 0, 2] : vector<4x8x8xf32> -> vector<8x4x8xf32>
    %44 = vector.shape_cast %43 : vector<8x4x8xf32> to vector<8x32xf32>
    %c0_21 = arith.constant 0 : index
    %c0_22 = arith.constant 0 : index
    %c0_23 = arith.constant 0 : index
    %45 = vector.load %arg8[%c0_21, %c0_22, %c0_23] : memref<1x8x32xf32, #tpu.memory_space<vmem>>, vector<1x8x32xf32>
    %46 = vector.shape_cast %45 : vector<1x8x32xf32> to vector<8x32xf32>
    %47 = vector.shape_cast %44 : vector<8x32xf32> to vector<1x8x32xf32>
    tpu.vector_store %arg8[%c0_21, %c0_22, %c0_23], %47 {strides = array<i32>} : memref<1x8x32xf32, #tpu.memory_space<vmem>>, vector<1x8x32xf32>,
    return
  }
  func.func @transform_0(%arg0: i32, %arg1: i32) -> (i32, i32, i32) {
    %c0_i32 = arith.constant 0 : i32
    %c0_i32_0 = arith.constant 0 : i32
    %c0_i32_1 = arith.constant 0 : i32
    return %arg0, %c0_i32, %c0_i32_0 : i32, i32, i32
  }
  func.func @transform_1(%arg0: i32, %arg1: i32) -> (i32, i32, i32) {
    %c0_i32 = arith.constant 0 : i32
    %c0_i32_0 = arith.constant 0 : i32
    return %arg0, %arg1, %c0_i32 : i32, i32, i32
  }
  func.func @transform_2(%arg0: i32, %arg1: i32) -> (i32, i32, i32) {
    %c0_i32 = arith.constant 0 : i32
    %c0_i32_0 = arith.constant 0 : i32
    return %arg0, %arg1, %c0_i32 : i32, i32, i32
  }
  func.func @transform_3(%arg0: i32, %arg1: i32) -> (i32, i32) {
    %c0_i32 = arith.constant 0 : i32
    %c0_i32_0 = arith.constant 0 : i32
    %c0_i32_1 = arith.constant 0 : i32
    return %c0_i32, %c0_i32_0 : i32, i32
  }
  func.func @transform_4(%arg0: i32, %arg1: i32) -> (i32, i32) {
    %c0_i32 = arith.constant 0 : i32
    %c0_i32_0 = arith.constant 0 : i32
    %c0_i32_1 = arith.constant 0 : i32
    return %c0_i32, %c0_i32_0 : i32, i32
  }
  func.func @transform_5(%arg0: i32, %arg1: i32) -> (i32, i32) {
    %c0_i32 = arith.constant 0 : i32
    %c0_i32_0 = arith.constant 0 : i32
    %c0_i32_1 = arith.constant 0 : i32
    return %c0_i32, %c0_i32_0 : i32, i32
  }
  func.func @transform_6(%arg0: i32, %arg1: i32) -> (i32, i32, i32) {
    %c0_i32 = arith.constant 0 : i32
    %c0_i32_0 = arith.constant 0 : i32
    return %arg0, %arg1, %c0_i32 : i32, i32, i32
  }
}

</mosaic_0001>

<llo_original>
// kernel: tpu_custom_call.1
$region0: #{tpu_custom_call.1}
  #allocation0 [shape = 'u32[]', space=smem, size = 0x4, offset = 0x4, fixed_abs, tag = 'smem constant byte address 0x4 - core index']
  #allocation1 [shape = 'u32[144,128]{1,0:T(1,128)}', space=vmem, size = 0x12000, scoped, tag = 'internal scratch']
  %s0 = inlined_call_operand.vmem [shape: f32[2,8,32], index: 0, kind: input, shape index: {}]
  %s1 = inlined_call_operand.vmem [shape: f32[2,64,32], index: 1, kind: input, shape index: {}]
  %s2 = inlined_call_operand.vmem [shape: f32[2,8,8], index: 2, kind: input, shape index: {}]
  %s3 = inlined_call_operand.vmem [shape: f32[32,32], index: 3, kind: input, shape index: {}]
  %s4 = inlined_call_operand.vmem [shape: f32[32,8], index: 4, kind: input, shape index: {}]
  %s5 = inlined_call_operand.vmem [shape: f32[32,4], index: 5, kind: input, shape index: {}]
  %s6 = inlined_call_operand.hbm [shape: f32[2,8,32], index: 6, kind: output, shape index: {}]
  %s7 = sld [smem:[#allocation0]]
  $region57: #{tpu_custom_call.1} parent=0
    _
  %s9 = ssub.s32 1, %s7
  %s10 = scalar_select 0, %s9, %s7
  $region1: #{tpu_custom_call.1} parent=0
    #allocation2 [shape = 'u8[8192]{0}', space=vmem, size = 0x2000, scoped, tag = 'output window, operand 0']
    #allocation3 [shape = 's32[2]{0}', space=sflag, size = 0x8, scoped, tag = 'scoped memory for tpu_custom_call.1']
    %11 = vsyncpa [#allocation3], 0
    %s12 = scalar_lea.sflag [#allocation3], 1
    %13 = vsyncpa %s12, 0
    loop: start=0, step=1, limit=4
    $region2: #{tpu_custom_call.1} parent=1 // loop_pre_header
      _
    $region3: #{tpu_custom_call.1} parent=1 // loop_header
      %s15 = sphi 0, %s19
      %p16 = scmp.ge.s32.totalorder %s15, 4
      %s22 = sphi 0, %s34
      %s23 = sphi 0, %s30
      %s24 = sphi 0, %s22
      %s25 = sphi 0, %s23
      %s26 = sphi 0, %s24
      %s27 = sphi 0, %s25
      %s37 = sphi 0, %s39
      %s40 = sphi 0, %s37
      %s41 = sphi 0, %s40
      %s57 = sphi 0, %s41
      %s65 = sphi 0, %s67
      %s68 = sphi 0, %s65
      %s69 = sphi 0, %s68
      %s85 = sphi 0, %s69
      %s93 = sphi 0, %s95
      %s96 = sphi 0, %s93
      %s97 = sphi 0, %s96
      %s113 = sphi 0, %s97
      %s117 = sphi 0, %s117
      %s119 = sphi 0, %s117
      %s120 = sphi 0, %s119
      %s134 = sphi 0, %s120
      %s138 = sphi 0, %s138
      %s140 = sphi 0, %s138
      %s141 = sphi 0, %s140
      %s155 = sphi 0, %s141
      %s159 = sphi 0, %s159
      %s161 = sphi 0, %s159
      %s162 = sphi 0, %s161
      %s176 = sphi 0, %s162
      %s184 = sphi 0, %s186
      %s187 = sphi 0, %s184
      %s188 = sphi 0, %s187
      %s204 = sphi 0, %s188
    $region4: #{tpu_custom_call.1} parent=1 // loop_header_branch
      %18 = sbr.rel (%p16) target = $region8
    $region5: #{tpu_custom_call.1} parent=1 // loop_body
      %s20 = ssub.s32 %s15, 1
      %s21 = ssub.s32 %s15, 2
      %s28 = sadd.s32 1, %s23
      %p29 = scmp.ge.s32.totalorder %s28, 1
      %s30 = scalar_select %p29, 0, %s28
      %s31 = sadd.s32 1, %s22
      %s32 = scalar_select %p29, %s31, %s22
      %p33 = scmp.ge.s32.totalorder %s32, 2
      %s34 = scalar_select %p33, 0, %s32
      %s35 = ssub.s32 %s22, %s34
      %p36 = scmp.eq.s32.totalorder %s35, 0
      %s38 = sadd.s32 %s37, 1
      %s39 = scalar_select %p36, %s37, %s38
      %p42 = pneg %p36
      %p43 = scmp.eq.s32.totalorder %s15, 1
      %p44 = por %p42, %p43
      %p45 = scmp.ne.s32.totalorder %s37, %s40
      %p46 = scmp.eq.s32.totalorder %s15, 0
      %p47 = por %p45, %p46
      %p48 = scmp.ne.s32.totalorder %s37, %s40
      %p49 = scmp.eq.s32.totalorder %s20, 1
      %p50 = por %p48, %p49
      %p51 = scmp.ne.s32.totalorder %s40, %s41
      %p52 = scmp.eq.s32.totalorder %s20, 0
      %p53 = por %p51, %p52
      %p54 = scmp.ne.s32.totalorder %s40, %s41
      %p55 = scmp.eq.s32.totalorder %s21, 1
      %p56 = por %p54, %p55
      %p58 = scmp.ne.s32.totalorder %s41, %s57
      %p59 = scmp.eq.s32.totalorder %s21, 0
      %p60 = por %p58, %p59
      %s61 = ssub.s32 %s22, %s34
      %s62 = ssub.s32 %s23, %s30
      %s63 = sor.u32 %s61, %s62
      %p64 = scmp.eq.s32.totalorder %s63, 0
      %s66 = sadd.s32 %s65, 1
      %s67 = scalar_select %p64, %s65, %s66
      %p70 = pneg %p64
      %p71 = scmp.eq.s32.totalorder %s15, 1
      %p72 = por %p70, %p71
      %p73 = scmp.ne.s32.totalorder %s65, %s68
      %p74 = scmp.eq.s32.totalorder %s15, 0
      %p75 = por %p73, %p74
      %p76 = scmp.ne.s32.totalorder %s65, %s68
      %p77 = scmp.eq.s32.totalorder %s20, 1
      %p78 = por %p76, %p77
      %p79 = scmp.ne.s32.totalorder %s68, %s69
      %p80 = scmp.eq.s32.totalorder %s20, 0
      %p81 = por %p79, %p80
      %p82 = scmp.ne.s32.totalorder %s68, %s69
      %p83 = scmp.eq.s32.totalorder %s21, 1
      %p84 = por %p82, %p83
      %p86 = scmp.ne.s32.totalorder %s69, %s85
      %p87 = scmp.eq.s32.totalorder %s21, 0
      %p88 = por %p86, %p87
      %s89 = ssub.s32 %s22, %s34
      %s90 = ssub.s32 %s23, %s30
      %s91 = sor.u32 %s89, %s90
      %p92 = scmp.eq.s32.totalorder %s91, 0
      %s94 = sadd.s32 %s93, 1
      %s95 = scalar_select %p92, %s93, %s94
      %p98 = pneg %p92
      %p99 = scmp.eq.s32.totalorder %s15, 1
      %p100 = por %p98, %p99
      %p101 = scmp.ne.s32.totalorder %s93, %s96
      %p102 = scmp.eq.s32.totalorder %s15, 0
      %p103 = por %p101, %p102
      %p104 = scmp.ne.s32.totalorder %s93, %s96
      %p105 = scmp.eq.s32.totalorder %s20, 1
      %p106 = por %p104, %p105
      %p107 = scmp.ne.s32.totalorder %s96, %s97
      %p108 = scmp.eq.s32.totalorder %s20, 0
      %p109 = por %p107, %p108
      %p110 = scmp.ne.s32.totalorder %s96, %s97
      %p111 = scmp.eq.s32.totalorder %s21, 1
      %p112 = por %p110, %p111
      %p114 = scmp.ne.s32.totalorder %s97, %s113
      %p115 = scmp.eq.s32.totalorder %s21, 0
      %p116 = por %p114, %p115
      %s118 = sadd.s32 %s117, 1
      %p121 = scmp.eq.s32.totalorder %s15, 1
      %p122 = scmp.ne.s32.totalorder %s117, %s119
      %p123 = scmp.eq.s32.totalorder %s15, 0
      %p124 = por %p122, %p123
      %p125 = scmp.ne.s32.totalorder %s117, %s119
      %p126 = scmp.eq.s32.totalorder %s20, 1
      %p127 = por %p125, %p126
      %p128 = scmp.ne.s32.totalorder %s119, %s120
      %p129 = scmp.eq.s32.totalorder %s20, 0
      %p130 = por %p128, %p129
      %p131 = scmp.ne.s32.totalorder %s119, %s120
      %p132 = scmp.eq.s32.totalorder %s21, 1
      %p133 = por %p131, %p132
      %p135 = scmp.ne.s32.totalorder %s120, %s134
      %p136 = scmp.eq.s32.totalorder %s21, 0
      %p137 = por %p135, %p136
      %s139 = sadd.s32 %s138, 1
      %p142 = scmp.eq.s32.totalorder %s15, 1
      %p143 = scmp.ne.s32.totalorder %s138, %s140
      %p144 = scmp.eq.s32.totalorder %s15, 0
      %p145 = por %p143, %p144
      %p146 = scmp.ne.s32.totalorder %s138, %s140
      %p147 = scmp.eq.s32.totalorder %s20, 1
      %p148 = por %p146, %p147
      %p149 = scmp.ne.s32.totalorder %s140, %s141
      %p150 = scmp.eq.s32.totalorder %s20, 0
      %p151 = por %p149, %p150
      %p152 = scmp.ne.s32.totalorder %s140, %s141
      %p153 = scmp.eq.s32.totalorder %s21, 1
      %p154 = por %p152, %p153
      %p156 = scmp.ne.s32.totalorder %s141, %s155
      %p157 = scmp.eq.s32.totalorder %s21, 0
      %p158 = por %p156, %p157
      %s160 = sadd.s32 %s159, 1
      %p163 = scmp.eq.s32.totalorder %s15, 1
      %p164 = scmp.ne.s32.totalorder %s159, %s161
      %p165 = scmp.eq.s32.totalorder %s15, 0
      %p166 = por %p164, %p165
      %p167 = scmp.ne.s32.totalorder %s159, %s161
      %p168 = scmp.eq.s32.totalorder %s20, 1
      %p169 = por %p167, %p168
      %p170 = scmp.ne.s32.totalorder %s161, %s162
      %p171 = scmp.eq.s32.totalorder %s20, 0
      %p172 = por %p170, %p171
      %p173 = scmp.ne.s32.totalorder %s161, %s162
      %p174 = scmp.eq.s32.totalorder %s21, 1
      %p175 = por %p173, %p174
      %p177 = scmp.ne.s32.totalorder %s162, %s176
      %p178 = scmp.eq.s32.totalorder %s21, 0
      %p179 = por %p177, %p178
      %s180 = ssub.s32 %s22, %s34
      %s181 = ssub.s32 %s23, %s30
      %s182 = sor.u32 %s180, %s181
      %p183 = scmp.eq.s32.totalorder %s182, 0
      %s185 = sadd.s32 %s184, 1
      %s186 = scalar_select %p183, %s184, %s185
      %p189 = pneg %p183
      %p190 = scmp.eq.s32.totalorder %s15, 1
      %p191 = por %p189, %p190
      %p192 = scmp.ne.s32.totalorder %s184, %s187
      %p193 = scmp.eq.s32.totalorder %s15, 0
      %p194 = por %p192, %p193
      %p195 = scmp.ne.s32.totalorder %s184, %s187
      %p196 = scmp.eq.s32.totalorder %s20, 1
      %p197 = por %p195, %p196
      %p198 = scmp.ne.s32.totalorder %s187, %s188
      %p199 = scmp.eq.s32.totalorder %s20, 0
      %p200 = por %p198, %p199
      %p201 = scmp.ne.s32.totalorder %s187, %s188
      %p202 = scmp.eq.s32.totalorder %s21, 1
      %p203 = por %p201, %p202
      %p205 = scmp.ne.s32.totalorder %s188, %s204
      %p206 = scmp.eq.s32.totalorder %s21, 0
      %p207 = por %p205, %p206
      %p208 = scmp.le.s32.totalorder 1, %s15
      %p209 = scmp.lt.s32.totalorder %s15, 3
      %p210 = pnand %p208, %p209
      %p211 = pneg %p210
      // Predicated region
      $region9: #{tpu_custom_call.1} parent=5 // pred_check
        _
      $region10: #{tpu_custom_call.1} parent=5 // pred_check_branch
        %213 = sbr.rel (%p210) target = $region12
      $region11: #{tpu_custom_call.1} parent=5 // pred_region
        %s214 = ssub.s32 %s15, 1
        // Predicated region
        $region13: #{tpu_custom_call.1} parent=11 // pred_check
          %p215 = pneg %p130
        $region14: #{tpu_custom_call.1} parent=11 // pred_check_branch
          %217 = sbr.rel (%p215) target = $region16
        $region15: #{tpu_custom_call.1} parent=11 // pred_region
          _
        $region16: #{tpu_custom_call.1} parent=11 // pred_fallthru
          _
        // Predicated region
        $region17: #{tpu_custom_call.1} parent=11 // pred_check
          %p218 = pneg %p151
        $region18: #{tpu_custom_call.1} parent=11 // pred_check_branch
          %220 = sbr.rel (%p218) target = $region20
        $region19: #{tpu_custom_call.1} parent=11 // pred_region
          _
        $region20: #{tpu_custom_call.1} parent=11 // pred_fallthru
          _
        // Predicated region
        $region21: #{tpu_custom_call.1} parent=11 // pred_check
          %p221 = pneg %p172
        $region22: #{tpu_custom_call.1} parent=11 // pred_check_branch
          %223 = sbr.rel (%p221) target = $region24
        $region23: #{tpu_custom_call.1} parent=11 // pred_region
          _
        $region24: #{tpu_custom_call.1} parent=11 // pred_fallthru
          _
      $region12: #{tpu_custom_call.1} parent=5 // pred_fallthru
        _
      %p224 = scmp.lt.s32.totalorder %s15, 2
      // Predicated region
      $region25: #{tpu_custom_call.1} parent=5 // pred_check
        %p225 = pneg %p224
      $region26: #{tpu_custom_call.1} parent=5 // pred_check_branch
        %227 = sbr.rel (%p225) target = $region28
      $region27: #{tpu_custom_call.1} parent=5 // pred_region
        // Predicated region
        $region29: #{tpu_custom_call.1} parent=27 // pred_check
          %p228 = pneg %p47
        $region30: #{tpu_custom_call.1} parent=27 // pred_check_branch
          %230 = sbr.rel (%p228) target = $region32
        $region31: #{tpu_custom_call.1} parent=27 // pred_region
          %p231 = scmp.lt.s32.totalorder %s22, 1
          %s232 = scalar_select %p231, %s22, 1
          %s233 = smul.addr %s232, 8
          %s234 = scalar_lea.vmem %s0, %s233
        $region32: #{tpu_custom_call.1} parent=27 // pred_fallthru
          _
        // Predicated region
        $region33: #{tpu_custom_call.1} parent=27 // pred_check
          %p235 = pneg %p75
        $region34: #{tpu_custom_call.1} parent=27 // pred_check_branch
          %237 = sbr.rel (%p235) target = $region36
        $region35: #{tpu_custom_call.1} parent=27 // pred_region
          %s238 = smul.u32 8, %s23
          %p239 = scmp.lt.s32.totalorder %s22, 1
          %s240 = scalar_select %p239, %s22, 1
          %p241 = scmp.lt.s32.totalorder %s238, 7
          %s242 = scalar_select %p241, %s238, 7
          %s243 = smul.addr %s240, 8
          %s244 = sadd.s32 %s242, %s243
          %s245 = smul.addr %s244, 8
          %s246 = scalar_lea.vmem %s1, %s245
          %s247 = smul.u32 8, %s23
        $region36: #{tpu_custom_call.1} parent=27 // pred_fallthru
          _
        // Predicated region
        $region37: #{tpu_custom_call.1} parent=27 // pred_check
          %p248 = pneg %p103
        $region38: #{tpu_custom_call.1} parent=27 // pred_check_branch
          %250 = sbr.rel (%p248) target = $region40
        $region39: #{tpu_custom_call.1} parent=27 // pred_region
          %p251 = scmp.lt.s32.totalorder %s22, 1
          %s252 = scalar_select %p251, %s22, 1
          %p253 = scmp.lt.s32.totalorder %s23, 0
          %s254 = scalar_select %p253, %s23, 0
          %s255 = sadd.s32 %s254, %s252
          %s256 = smul.addr %s255, 8
          %s257 = scalar_lea.vmem %s2, %s256
        $region40: #{tpu_custom_call.1} parent=27 // pred_fallthru
          _
      $region28: #{tpu_custom_call.1} parent=5 // pred_fallthru
        _
      %p258 = scmp.le.s32.totalorder 1, %s15
      %p259 = scmp.lt.s32.totalorder %s15, 3
      %p260 = pnand %p258, %p259
      %p261 = pneg %p260
      // Predicated region
      $region41: #{tpu_custom_call.1} parent=5 // pred_check
        _
      $region42: #{tpu_custom_call.1} parent=5 // pred_check_branch
        %263 = sbr.rel (%p260) target = $region44
      $region43: #{tpu_custom_call.1} parent=5 // pred_region
        %s264 = ssub.s32 %s15, 1
        %p265 = scmp.lt.s32.totalorder %s24, 1
        %s266 = scalar_select %p265, %s24, 1
        %s267 = smul.addr %s266, 8
        %s268 = scalar_lea.vmem %s0, %s267
        %p269 = pneg %p53
        %p270 = pneg %p50
        %s271 = smul.u32 8, %s25
        %p272 = scmp.lt.s32.totalorder %s24, 1
        %s273 = scalar_select %p272, %s24, 1
        %p274 = scmp.lt.s32.totalorder %s271, 7
        %s275 = scalar_select %p274, %s271, 7
        %s276 = smul.addr %s273, 8
        %s277 = sadd.s32 %s275, %s276
        %s278 = smul.addr %s277, 8
        %s279 = scalar_lea.vmem %s1, %s278
        %p280 = pneg %p81
        %p281 = pneg %p78
        %p282 = scmp.lt.s32.totalorder %s24, 1
        %s283 = scalar_select %p282, %s24, 1
        %p284 = scmp.lt.s32.totalorder %s25, 0
        %s285 = scalar_select %p284, %s25, 0
        %s286 = sadd.s32 %s285, %s283
        %s287 = smul.addr %s286, 8
        %s288 = scalar_lea.vmem %s2, %s287
        %p289 = pneg %p109
        %p290 = pneg %p106
        %p291 = pneg %p130
        %p292 = pneg %p127
        %p293 = pneg %p151
        %p294 = pneg %p148
        %p295 = pneg %p172
        %p296 = pneg %p169
        %p297 = pneg %p200
        %p298 = pneg %p197
        %s299 = sand.u32 %s187, 1
        %s300 = scalar_lea.sflag [#allocation3], %s299
        %s301 = sand.u32 %s187, 1
        %s302 = smul.addr %s301, 8
        %s303 = scalar_lea.vmem [#allocation2], %s302
        %p304 = scmp.lt.s32.totalorder %s24, 1
        %s305 = scalar_select %p304, %s24, 1
        %s306 = smul.addr %s305, 8
        %s307 = scalar_lea.vmem %s0, %s306
        %s308 = smul.u32 8, %s25
        %p309 = scmp.lt.s32.totalorder %s24, 1
        %s310 = scalar_select %p309, %s24, 1
        %p311 = scmp.lt.s32.totalorder %s308, 7
        %s312 = scalar_select %p311, %s308, 7
        %s313 = smul.addr %s310, 8
        %s314 = sadd.s32 %s312, %s313
        %s315 = smul.addr %s314, 8
        %s316 = scalar_lea.vmem %s1, %s315
        %s317 = smul.u32 8, %s25
        %p318 = scmp.lt.s32.totalorder %s24, 1
        %s319 = scalar_select %p318, %s24, 1
        %p320 = scmp.lt.s32.totalorder %s25, 0
        %s321 = scalar_select %p320, %s25, 0
        %s322 = sadd.s32 %s321, %s319
        %s323 = smul.addr %s322, 8
        %s324 = scalar_lea.vmem %s2, %s323
        %v325 = vld [vmem:[%s307] sm:$0xff]
        %v326 = vld [vmem:[%s3] sm:$0xff]
        %v327 = vld [vmem:[%s3 + $0x8] sm:$0xff]
        %v328 = vld [vmem:[%s3 + $0x10] sm:$0xff]
        %v329 = vld [vmem:[%s3 + $0x18] sm:$0xff]
        %vm330 = vcmask 261120
        %v332 = vsel %vm330, %v325, 0
        %334 = vmatprep.subr.mxu0 0.0
        %335 = vmatpush1.msra.mxu0 %v326
        %336 = vmatprep.subr.mxu0 0.0
        %337 = vmatpush1.msra.mxu0 %v327
        %338 = vmatprep.subr.mxu0 0.0
        %339 = vmatpush1.msra.mxu0 %v328
        %340 = vmatprep.subr.mxu0 0.0
        %341 = vmatpush1.msra.mxu0 %v329
        %342 = vmatprep.subr.mxu0 0.0
        %343 = vmatpush1.msra.mxu0 0.0
        %344 = vmatprep.subr.mxu0 0.0
        %345 = vmatpush1.msra.mxu0 0.0
        %346 = vmatprep.subr.mxu0 0.0
        %347 = vmatpush1.msra.mxu0 0.0
        %348 = vmatprep.subr.mxu0 0.0
        %349 = vmatpush1.msra.mxu0 0.0
        %350 = vmatprep.subr.mxu0 0.0
        %351 = vmatpush1.msra.mxu0 0.0
        %352 = vmatprep.subr.mxu0 0.0
        %353 = vmatpush1.msra.mxu0 0.0
        %354 = vmatprep.subr.mxu0 0.0
        %355 = vmatpush1.msra.mxu0 0.0
        %356 = vmatprep.subr.mxu0 0.0
        %357 = vmatpush1.msra.mxu0 0.0
        %358 = vmatprep.subr.mxu0 0.0
        %359 = vmatpush1.msra.mxu0 0.0
        %360 = vmatprep.subr.mxu0 0.0
        %361 = vmatpush1.msra.mxu0 0.0
        %362 = vmatprep.subr.mxu0 0.0
        %363 = vmatpush1.msra.mxu0 0.0
        %364 = vmatprep.subr.mxu0 0.0
        %365 = vmatpush1.msra.mxu0 0.0
        %366 = vmatprep.subr.mxu0 0.0
        %367 = vmatpush1.msra.mxu0 0.0
        %368 = vmatprep.subr.mxu0 0.0
        %369 = vmatpush1.msra.mxu0 0.0
        %370 = vmatprep.subr.mxu0 0.0
        %371 = vmatpush1.msra.mxu0 0.0
        %372 = vmatprep.subr.mxu0 0.0
        %373 = vmatpush1.msra.mxu0 0.0
        %374 = vmatprep.subr.mxu0 0.0
        %375 = vmatpush1.msra.mxu0 0.0
        %376 = vmatprep.subr.mxu0 0.0
        %377 = vmatpush1.msra.mxu0 0.0
        %378 = vmatprep.subr.mxu0 0.0
        %379 = vmatpush1.msra.mxu0 0.0
        %380 = vmatprep.subr.mxu0 0.0
        %381 = vmatpush1.msra.mxu0 0.0
        %382 = vmatprep.subr.mxu0 0.0
        %383 = vmatpush1.msra.mxu0 0.0
        %384 = vmatprep.subr.mxu0 0.0
        %385 = vmatpush1.msra.mxu0 0.0
        %386 = vmatprep.subr.mxu0 0.0
        %387 = vmatpush1.msra.mxu0 0.0
        %388 = vmatprep.subr.mxu0 0.0
        %389 = vmatpush1.msra.mxu0 0.0
        %390 = vmatprep.subr.mxu0 0.0
        %391 = vmatpush1.msra.mxu0 0.0
        %392 = vmatprep.subr.mxu0 0.0
        %393 = vmatpush1.msra.mxu0 0.0
        %394 = vmatprep.subr.mxu0 0.0
        %395 = vmatpush1.msra.mxu0 0.0
        %396 = vmatprep.subr.mxu0 0.0
        %397 = vmatpush1.msra.mxu0 0.0
        %398 = vmatprep.mubr.f32.mxu0 0.0
        %399 = vmatmul.mubr.f32.gmra.mrb[0].mxu0 %v332
        %v400 = vpop.f32.mrb[0].mxu0
        %v401 = vadd.f32 0.0, %v400
        %v402 = vpop.f32.mrb[0].mxu0
        %403 = vdwg.mxu0
        %v404 = vld [vmem:[%s4] sm:$0xff]
        %v405 = vld [vmem:[%s4 + $0x8] sm:$0xff]
        %v406 = vld [vmem:[%s4 + $0x10] sm:$0xff]
        %v407 = vld [vmem:[%s4 + $0x18] sm:$0xff]
        %v409 = vsel %vm330, %v401, 0
        %411 = vmatprep.subr.mxu0 0.0
        %412 = vmatpush1.msra.mxu0 %v404
        %413 = vmatprep.subr.mxu0 0.0
        %414 = vmatpush1.msra.mxu0 %v405
        %415 = vmatprep.subr.mxu0 0.0
        %416 = vmatpush1.msra.mxu0 %v406
        %417 = vmatprep.subr.mxu0 0.0
        %418 = vmatpush1.msra.mxu0 %v407
        %419 = vmatprep.subr.mxu0 0.0
        %420 = vmatpush1.msra.mxu0 0.0
        %421 = vmatprep.subr.mxu0 0.0
        %422 = vmatpush1.msra.mxu0 0.0
        %423 = vmatprep.subr.mxu0 0.0
        %424 = vmatpush1.msra.mxu0 0.0
        %425 = vmatprep.subr.mxu0 0.0
        %426 = vmatpush1.msra.mxu0 0.0
        %427 = vmatprep.subr.mxu0 0.0
        %428 = vmatpush1.msra.mxu0 0.0
        %429 = vmatprep.subr.mxu0 0.0
        %430 = vmatpush1.msra.mxu0 0.0
        %431 = vmatprep.subr.mxu0 0.0
        %432 = vmatpush1.msra.mxu0 0.0
        %433 = vmatprep.subr.mxu0 0.0
        %434 = vmatpush1.msra.mxu0 0.0
        %435 = vmatprep.subr.mxu0 0.0
        %436 = vmatpush1.msra.mxu0 0.0
        %437 = vmatprep.subr.mxu0 0.0
        %438 = vmatpush1.msra.mxu0 0.0
        %439 = vmatprep.subr.mxu0 0.0
        %440 = vmatpush1.msra.mxu0 0.0
        %441 = vmatprep.subr.mxu0 0.0
        %442 = vmatpush1.msra.mxu0 0.0
        %443 = vmatprep.subr.mxu0 0.0
        %444 = vmatpush1.msra.mxu0 0.0
        %445 = vmatprep.subr.mxu0 0.0
        %446 = vmatpush1.msra.mxu0 0.0
        %447 = vmatprep.subr.mxu0 0.0
        %448 = vmatpush1.msra.mxu0 0.0
        %449 = vmatprep.subr.mxu0 0.0
        %450 = vmatpush1.msra.mxu0 0.0
        %451 = vmatprep.subr.mxu0 0.0
        %452 = vmatpush1.msra.mxu0 0.0
        %453 = vmatprep.subr.mxu0 0.0
        %454 = vmatpush1.msra.mxu0 0.0
        %455 = vmatprep.subr.mxu0 0.0
        %456 = vmatpush1.msra.mxu0 0.0
        %457 = vmatprep.subr.mxu0 0.0
        %458 = vmatpush1.msra.mxu0 0.0
        %459 = vmatprep.subr.mxu0 0.0
        %460 = vmatpush1.msra.mxu0 0.0
        %461 = vmatprep.subr.mxu0 0.0
        %462 = vmatpush1.msra.mxu0 0.0
        %463 = vmatprep.subr.mxu0 0.0
        %464 = vmatpush1.msra.mxu0 0.0
        %465 = vmatprep.subr.mxu0 0.0
        %466 = vmatpush1.msra.mxu0 0.0
        %467 = vmatprep.subr.mxu0 0.0
        %468 = vmatpush1.msra.mxu0 0.0
        %469 = vmatprep.subr.mxu0 0.0
        %470 = vmatpush1.msra.mxu0 0.0
        %471 = vmatprep.subr.mxu0 0.0
        %472 = vmatpush1.msra.mxu0 0.0
        %473 = vmatprep.subr.mxu0 0.0
        %474 = vmatpush1.msra.mxu0 0.0
        %475 = vmatprep.mubr.f32.mxu0 0.0
        %476 = vmatmul.mubr.f32.gmra.mrb[0].mxu0 %v409
        %v477 = vpop.f32.mrb[0].mxu0
        %v478 = vadd.f32 0.0, %v477
        %v479 = vpop.f32.mrb[0].mxu0
        %480 = vdwg.mxu0
        %481 = vxpose.xlu0.b32.start [1/16] %v478, 128
        %482 = vxpose.xlu0.b32.cont [2/16] 0.0, 128
        %483 = vxpose.xlu0.b32.cont [3/16] 0.0, 128
        %484 = vxpose.xlu0.b32.cont [4/16] 0.0, 128
        %485 = vxpose.xlu0.b32.cont [5/16] 0.0, 128
        %486 = vxpose.xlu0.b32.cont [6/16] 0.0, 128
        %487 = vxpose.xlu0.b32.cont [7/16] 0.0, 128
        %488 = vxpose.xlu0.b32.cont [8/16] 0.0, 128
        %489 = vxpose.xlu0.b32.cont [9/16] 0.0, 128
        %490 = vxpose.xlu0.b32.cont [10/16] 0.0, 128
        %491 = vxpose.xlu0.b32.cont [11/16] 0.0, 128
        %492 = vxpose.xlu0.b32.cont [12/16] 0.0, 128
        %493 = vxpose.xlu0.b32.cont [13/16] 0.0, 128
        %494 = vxpose.xlu0.b32.cont [14/16] 0.0, 128
        %495 = vxpose.xlu0.b32.cont [15/16] 0.0, 128
        %496 = vxpose.xlu0.b32.end [16/16] 0.0, 128
        %v497 = vpop.trf.xlu0
        %v498 = vpop.trf.xlu0
        %v499 = vpop.trf.xlu0
        %v500 = vpop.trf.xlu0
        %v501 = vpop.trf.xlu0
        %v502 = vpop.trf.xlu0
        %v503 = vpop.trf.xlu0
        %v504 = vpop.trf.xlu0
        %v505 = vpop.trf.xlu0
        %v506 = vpop.trf.xlu0
        %v507 = vpop.trf.xlu0
        %v508 = vpop.trf.xlu0
        %v509 = vpop.trf.xlu0
        %v510 = vpop.trf.xlu0
        %v511 = vpop.trf.xlu0
        %v512 = vpop.trf.xlu0
        %v513 = vld [vmem:[%s316] sm:$0xff]
        %v514 = vld [vmem:[%s316 + $0x8] sm:$0xff]
        %v515 = vld [vmem:[%s316 + $0x10] sm:$0xff]
        %v516 = vld [vmem:[%s316 + $0x18] sm:$0xff]
        %v517 = vld [vmem:[%s316 + $0x20] sm:$0xff]
        %v518 = vld [vmem:[%s316 + $0x28] sm:$0xff]
        %v519 = vld [vmem:[%s316 + $0x30] sm:$0xff]
        %v520 = vld [vmem:[%s316 + $0x38] sm:$0xff]
        %v521 = vld [vmem:[%s5] sm:$0xff]
        %v522 = vld [vmem:[%s5 + $0x8] sm:$0xff]
        %v523 = vld [vmem:[%s5 + $0x10] sm:$0xff]
        %v524 = vld [vmem:[%s5 + $0x18] sm:$0xff]
        %v526 = vsel %vm330, %v513, 0
        %v529 = vsel %vm330, %v514, 0
        %v532 = vsel %vm330, %v515, 0
        %v535 = vsel %vm330, %v516, 0
        %v538 = vsel %vm330, %v517, 0
        %v541 = vsel %vm330, %v518, 0
        %v544 = vsel %vm330, %v519, 0
        %v547 = vsel %vm330, %v520, 0
        %549 = vmatprep.subr.mxu0 0.0
        %550 = vmatpush1.msra.mxu0 %v521
        %551 = vmatprep.subr.mxu0 0.0
        %552 = vmatpush1.msra.mxu0 %v522
        %553 = vmatprep.subr.mxu0 0.0
        %554 = vmatpush1.msra.mxu0 %v523
        %555 = vmatprep.subr.mxu0 0.0
        %556 = vmatpush1.msra.mxu0 %v524
        %557 = vmatprep.subr.mxu0 0.0
        %558 = vmatpush1.msra.mxu0 0.0
        %559 = vmatprep.subr.mxu0 0.0
        %560 = vmatpush1.msra.mxu0 0.0
        %561 = vmatprep.subr.mxu0 0.0
        %562 = vmatpush1.msra.mxu0 0.0
        %563 = vmatprep.subr.mxu0 0.0
        %564 = vmatpush1.msra.mxu0 0.0
        %565 = vmatprep.subr.mxu0 0.0
        %566 = vmatpush1.msra.mxu0 0.0
        %567 = vmatprep.subr.mxu0 0.0
        %568 = vmatpush1.msra.mxu0 0.0
        %569 = vmatprep.subr.mxu0 0.0
        %570 = vmatpush1.msra.mxu0 0.0
        %571 = vmatprep.subr.mxu0 0.0
        %572 = vmatpush1.msra.mxu0 0.0
        %573 = vmatprep.subr.mxu0 0.0
        %574 = vmatpush1.msra.mxu0 0.0
        %575 = vmatprep.subr.mxu0 0.0
        %576 = vmatpush1.msra.mxu0 0.0
        %577 = vmatprep.subr.mxu0 0.0
        %578 = vmatpush1.msra.mxu0 0.0
        %579 = vmatprep.subr.mxu0 0.0
        %580 = vmatpush1.msra.mxu0 0.0
        %581 = vmatprep.subr.mxu0 0.0
        %582 = vmatpush1.msra.mxu0 0.0
        %583 = vmatprep.subr.mxu0 0.0
        %584 = vmatpush1.msra.mxu0 0.0
        %585 = vmatprep.subr.mxu0 0.0
        %586 = vmatpush1.msra.mxu0 0.0
        %587 = vmatprep.subr.mxu0 0.0
        %588 = vmatpush1.msra.mxu0 0.0
        %589 = vmatprep.subr.mxu0 0.0
        %590 = vmatpush1.msra.mxu0 0.0
        %591 = vmatprep.subr.mxu0 0.0
        %592 = vmatpush1.msra.mxu0 0.0
        %593 = vmatprep.subr.mxu0 0.0
        %594 = vmatpush1.msra.mxu0 0.0
        %595 = vmatprep.subr.mxu0 0.0
        %596 = vmatpush1.msra.mxu0 0.0
        %597 = vmatprep.subr.mxu0 0.0
        %598 = vmatpush1.msra.mxu0 0.0
        %599 = vmatprep.subr.mxu0 0.0
        %600 = vmatpush1.msra.mxu0 0.0
        %601 = vmatprep.subr.mxu0 0.0
        %602 = vmatpush1.msra.mxu0 0.0
        %603 = vmatprep.subr.mxu0 0.0
        %604 = vmatpush1.msra.mxu0 0.0
        %605 = vmatprep.subr.mxu0 0.0
        %606 = vmatpush1.msra.mxu0 0.0
        %607 = vmatprep.subr.mxu0 0.0
        %608 = vmatpush1.msra.mxu0 0.0
        %609 = vmatprep.subr.mxu0 0.0
        %610 = vmatpush1.msra.mxu0 0.0
        %611 = vmatprep.subr.mxu0 0.0
        %612 = vmatpush1.msra.mxu0 0.0
        %613 = vmatprep.mubr.f32.mxu0 0.0
        %614 = vmatmul.mubr.f32.gmra.mrb[0].mxu0 %v526
        %v615 = vpop.f32.mrb[0].mxu0
        %v616 = vadd.f32 0.0, %v615
        %v617 = vpop.f32.mrb[0].mxu0
        %618 = vmatprep.mubr.f32.mxu0 0.0
        %619 = vmatmul.mubr.f32.gmra.mrb[0].mxu0 %v529
        %v620 = vpop.f32.mrb[0].mxu0
        %v621 = vadd.f32 0.0, %v620
        %v622 = vpop.f32.mrb[0].mxu0
        %623 = vmatprep.mubr.f32.mxu0 0.0
        %624 = vmatmul.mubr.f32.gmra.mrb[0].mxu0 %v532
        %v625 = vpop.f32.mrb[0].mxu0
        %v626 = vadd.f32 0.0, %v625
        %v627 = vpop.f32.mrb[0].mxu0
        %628 = vmatprep.mubr.f32.mxu0 0.0
        %629 = vmatmul.mubr.f32.gmra.mrb[0].mxu0 %v535
        %v630 = vpop.f32.mrb[0].mxu0
        %v631 = vadd.f32 0.0, %v630
        %v632 = vpop.f32.mrb[0].mxu0
        %633 = vmatprep.mubr.f32.mxu0 0.0
        %634 = vmatmul.mubr.f32.gmra.mrb[0].mxu0 %v538
        %v635 = vpop.f32.mrb[0].mxu0
        %v636 = vadd.f32 0.0, %v635
        %v637 = vpop.f32.mrb[0].mxu0
        %638 = vmatprep.mubr.f32.mxu0 0.0
        %639 = vmatmul.mubr.f32.gmra.mrb[0].mxu0 %v541
        %v640 = vpop.f32.mrb[0].mxu0
        %v641 = vadd.f32 0.0, %v640
        %v642 = vpop.f32.mrb[0].mxu0
        %643 = vmatprep.mubr.f32.mxu0 0.0
        %644 = vmatmul.mubr.f32.gmra.mrb[0].mxu0 %v544
        %v645 = vpop.f32.mrb[0].mxu0
        %v646 = vadd.f32 0.0, %v645
        %v647 = vpop.f32.mrb[0].mxu0
        %648 = vmatprep.mubr.f32.mxu0 0.0
        %649 = vmatmul.mubr.f32.gmra.mrb[0].mxu0 %v547
        %v650 = vpop.f32.mrb[0].mxu0
        %v651 = vadd.f32 0.0, %v650
        %v652 = vpop.f32.mrb[0].mxu0
        %653 = vdwg.mxu0
        %654 = vxpose.xlu0.b32.start [1/16] %v616, 128
        %655 = vxpose.xlu0.b32.cont [2/16] 0.0, 128
        %656 = vxpose.xlu0.b32.cont [3/16] 0.0, 128
        %657 = vxpose.xlu0.b32.cont [4/16] 0.0, 128
        %658 = vxpose.xlu0.b32.cont [5/16] 0.0, 128
        %659 = vxpose.xlu0.b32.cont [6/16] 0.0, 128
        %660 = vxpose.xlu0.b32.cont [7/16] 0.0, 128
        %661 = vxpose.xlu0.b32.cont [8/16] 0.0, 128
        %662 = vxpose.xlu0.b32.cont [9/16] 0.0, 128
        %663 = vxpose.xlu0.b32.cont [10/16] 0.0, 128
        %664 = vxpose.xlu0.b32.cont [11/16] 0.0, 128
        %665 = vxpose.xlu0.b32.cont [12/16] 0.0, 128
        %666 = vxpose.xlu0.b32.cont [13/16] 0.0, 128
        %667 = vxpose.xlu0.b32.cont [14/16] 0.0, 128
        %668 = vxpose.xlu0.b32.cont [15/16] 0.0, 128
        %669 = vxpose.xlu0.b32.end [16/16] 0.0, 128
        %v670 = vpop.trf.xlu0
        %v671 = vpop.trf.xlu0
        %v672 = vpop.trf.xlu0
        %v673 = vpop.trf.xlu0
        %v674 = vpop.trf.xlu0
        %v675 = vpop.trf.xlu0
        %v676 = vpop.trf.xlu0
        %v677 = vpop.trf.xlu0
        %v678 = vpop.trf.xlu0
        %v679 = vpop.trf.xlu0
        %v680 = vpop.trf.xlu0
        %v681 = vpop.trf.xlu0
        %v682 = vpop.trf.xlu0
        %v683 = vpop.trf.xlu0
        %v684 = vpop.trf.xlu0
        %v685 = vpop.trf.xlu0
        %686 = vxpose.xlu0.b32.start [1/16] %v621, 128
        %687 = vxpose.xlu0.b32.cont [2/16] 0.0, 128
        %688 = vxpose.xlu0.b32.cont [3/16] 0.0, 128
        %689 = vxpose.xlu0.b32.cont [4/16] 0.0, 128
        %690 = vxpose.xlu0.b32.cont [5/16] 0.0, 128
        %691 = vxpose.xlu0.b32.cont [6/16] 0.0, 128
        %692 = vxpose.xlu0.b32.cont [7/16] 0.0, 128
        %693 = vxpose.xlu0.b32.cont [8/16] 0.0, 128
        %694 = vxpose.xlu0.b32.cont [9/16] 0.0, 128
        %695 = vxpose.xlu0.b32.cont [10/16] 0.0, 128
        %696 = vxpose.xlu0.b32.cont [11/16] 0.0, 128
        %697 = vxpose.xlu0.b32.cont [12/16] 0.0, 128
        %698 = vxpose.xlu0.b32.cont [13/16] 0.0, 128
        %699 = vxpose.xlu0.b32.cont [14/16] 0.0, 128
        %700 = vxpose.xlu0.b32.cont [15/16] 0.0, 128
        %701 = vxpose.xlu0.b32.end [16/16] 0.0, 128
        %v702 = vpop.trf.xlu0
        %v703 = vpop.trf.xlu0
        %v704 = vpop.trf.xlu0
        %v705 = vpop.trf.xlu0
        %v706 = vpop.trf.xlu0
        %v707 = vpop.trf.xlu0
        %v708 = vpop.trf.xlu0
        %v709 = vpop.trf.xlu0
        %v710 = vpop.trf.xlu0
        %v711 = vpop.trf.xlu0
        %v712 = vpop.trf.xlu0
        %v713 = vpop.trf.xlu0
        %v714 = vpop.trf.xlu0
        %v715 = vpop.trf.xlu0
        %v716 = vpop.trf.xlu0
        %v717 = vpop.trf.xlu0
        %718 = vxpose.xlu0.b32.start [1/16] %v626, 128
        %719 = vxpose.xlu0.b32.cont [2/16] 0.0, 128
        %720 = vxpose.xlu0.b32.cont [3/16] 0.0, 128
        %721 = vxpose.xlu0.b32.cont [4/16] 0.0, 128
        %722 = vxpose.xlu0.b32.cont [5/16] 0.0, 128
        %723 = vxpose.xlu0.b32.cont [6/16] 0.0, 128
        %724 = vxpose.xlu0.b32.cont [7/16] 0.0, 128
        %725 = vxpose.xlu0.b32.cont [8/16] 0.0, 128
        %726 = vxpose.xlu0.b32.cont [9/16] 0.0, 128
        %727 = vxpose.xlu0.b32.cont [10/16] 0.0, 128
        %728 = vxpose.xlu0.b32.cont [11/16] 0.0, 128
        %729 = vxpose.xlu0.b32.cont [12/16] 0.0, 128
        %730 = vxpose.xlu0.b32.cont [13/16] 0.0, 128
        %731 = vxpose.xlu0.b32.cont [14/16] 0.0, 128
        %732 = vxpose.xlu0.b32.cont [15/16] 0.0, 128
        %733 = vxpose.xlu0.b32.end [16/16] 0.0, 128
        %v734 = vpop.trf.xlu0
        %v735 = vpop.trf.xlu0
        %v736 = vpop.trf.xlu0
        %v737 = vpop.trf.xlu0
        %v738 = vpop.trf.xlu0
        %v739 = vpop.trf.xlu0
        %v740 = vpop.trf.xlu0
        %v741 = vpop.trf.xlu0
        %v742 = vpop.trf.xlu0
        %v743 = vpop.trf.xlu0
        %v744 = vpop.trf.xlu0
        %v745 = vpop.trf.xlu0
        %v746 = vpop.trf.xlu0
        %v747 = vpop.trf.xlu0
        %v748 = vpop.trf.xlu0
        %v749 = vpop.trf.xlu0
        %750 = vxpose.xlu0.b32.start [1/16] %v631, 128
        %751 = vxpose.xlu0.b32.cont [2/16] 0.0, 128
        %752 = vxpose.xlu0.b32.cont [3/16] 0.0, 128
        %753 = vxpose.xlu0.b32.cont [4/16] 0.0, 128
        %754 = vxpose.xlu0.b32.cont [5/16] 0.0, 128
        %755 = vxpose.xlu0.b32.cont [6/16] 0.0, 128
        %756 = vxpose.xlu0.b32.cont [7/16] 0.0, 128
        %757 = vxpose.xlu0.b32.cont [8/16] 0.0, 128
        %758 = vxpose.xlu0.b32.cont [9/16] 0.0, 128
        %759 = vxpose.xlu0.b32.cont [10/16] 0.0, 128
        %760 = vxpose.xlu0.b32.cont [11/16] 0.0, 128
        %761 = vxpose.xlu0.b32.cont [12/16] 0.0, 128
        %762 = vxpose.xlu0.b32.cont [13/16] 0.0, 128
        %763 = vxpose.xlu0.b32.cont [14/16] 0.0, 128
        %764 = vxpose.xlu0.b32.cont [15/16] 0.0, 128
        %765 = vxpose.xlu0.b32.end [16/16] 0.0, 128
        %v766 = vpop.trf.xlu0
        %v767 = vpop.trf.xlu0
        %v768 = vpop.trf.xlu0
        %v769 = vpop.trf.xlu0
        %v770 = vpop.trf.xlu0
        %v771 = vpop.trf.xlu0
        %v772 = vpop.trf.xlu0
        %v773 = vpop.trf.xlu0
        %v774 = vpop.trf.xlu0
        %v775 = vpop.trf.xlu0
        %v776 = vpop.trf.xlu0
        %v777 = vpop.trf.xlu0
        %v778 = vpop.trf.xlu0
        %v779 = vpop.trf.xlu0
        %v780 = vpop.trf.xlu0
        %v781 = vpop.trf.xlu0
        %782 = vxpose.xlu0.b32.start [1/16] %v636, 128
        %783 = vxpose.xlu0.b32.cont [2/16] 0.0, 128
        %784 = vxpose.xlu0.b32.cont [3/16] 0.0, 128
        %785 = vxpose.xlu0.b32.cont [4/16] 0.0, 128
        %786 = vxpose.xlu0.b32.cont [5/16] 0.0, 128
        %787 = vxpose.xlu0.b32.cont [6/16] 0.0, 128
        %788 = vxpose.xlu0.b32.cont [7/16] 0.0, 128
        %789 = vxpose.xlu0.b32.cont [8/16] 0.0, 128
        %790 = vxpose.xlu0.b32.cont [9/16] 0.0, 128
        %791 = vxpose.xlu0.b32.cont [10/16] 0.0, 128
        %792 = vxpose.xlu0.b32.cont [11/16] 0.0, 128
        %793 = vxpose.xlu0.b32.cont [12/16] 0.0, 128
        %794 = vxpose.xlu0.b32.cont [13/16] 0.0, 128
        %795 = vxpose.xlu0.b32.cont [14/16] 0.0, 128
        %796 = vxpose.xlu0.b32.cont [15/16] 0.0, 128
        %797 = vxpose.xlu0.b32.end [16/16] 0.0, 128
        %v798 = vpop.trf.xlu0
        %v799 = vpop.trf.xlu0
        %v800 = vpop.trf.xlu0
        %v801 = vpop.trf.xlu0
        %v802 = vpop.trf.xlu0
        %v803 = vpop.trf.xlu0
        %v804 = vpop.trf.xlu0
        %v805 = vpop.trf.xlu0
        %v806 = vpop.trf.xlu0
        %v807 = vpop.trf.xlu0
        %v808 = vpop.trf.xlu0
        %v809 = vpop.trf.xlu0
        %v810 = vpop.trf.xlu0
        %v811 = vpop.trf.xlu0
        %v812 = vpop.trf.xlu0
        %v813 = vpop.trf.xlu0
        %814 = vxpose.xlu0.b32.start [1/16] %v641, 128
        %815 = vxpose.xlu0.b32.cont [2/16] 0.0, 128
        %816 = vxpose.xlu0.b32.cont [3/16] 0.0, 128
        %817 = vxpose.xlu0.b32.cont [4/16] 0.0, 128
        %818 = vxpose.xlu0.b32.cont [5/16] 0.0, 128
        %819 = vxpose.xlu0.b32.cont [6/16] 0.0, 128
        %820 = vxpose.xlu0.b32.cont [7/16] 0.0, 128
        %821 = vxpose.xlu0.b32.cont [8/16] 0.0, 128
        %822 = vxpose.xlu0.b32.cont [9/16] 0.0, 128
        %823 = vxpose.xlu0.b32.cont [10/16] 0.0, 128
        %824 = vxpose.xlu0.b32.cont [11/16] 0.0, 128
        %825 = vxpose.xlu0.b32.cont [12/16] 0.0, 128
        %826 = vxpose.xlu0.b32.cont [13/16] 0.0, 128
        %827 = vxpose.xlu0.b32.cont [14/16] 0.0, 128
        %828 = vxpose.xlu0.b32.cont [15/16] 0.0, 128
        %829 = vxpose.xlu0.b32.end [16/16] 0.0, 128
        %v830 = vpop.trf.xlu0
        %v831 = vpop.trf.xlu0
        %v832 = vpop.trf.xlu0
        %v833 = vpop.trf.xlu0
        %v834 = vpop.trf.xlu0
        %v835 = vpop.trf.xlu0
        %v836 = vpop.trf.xlu0
        %v837 = vpop.trf.xlu0
        %v838 = vpop.trf.xlu0
        %v839 = vpop.trf.xlu0
        %v840 = vpop.trf.xlu0
        %v841 = vpop.trf.xlu0
        %v842 = vpop.trf.xlu0
        %v843 = vpop.trf.xlu0
        %v844 = vpop.trf.xlu0
        %v845 = vpop.trf.xlu0
        %846 = vxpose.xlu0.b32.start [1/16] %v646, 128
        %847 = vxpose.xlu0.b32.cont [2/16] 0.0, 128
        %848 = vxpose.xlu0.b32.cont [3/16] 0.0, 128
        %849 = vxpose.xlu0.b32.cont [4/16] 0.0, 128
        %850 = vxpose.xlu0.b32.cont [5/16] 0.0, 128
        %851 = vxpose.xlu0.b32.cont [6/16] 0.0, 128
        %852 = vxpose.xlu0.b32.cont [7/16] 0.0, 128
        %853 = vxpose.xlu0.b32.cont [8/16] 0.0, 128
        %854 = vxpose.xlu0.b32.cont [9/16] 0.0, 128
        %855 = vxpose.xlu0.b32.cont [10/16] 0.0, 128
        %856 = vxpose.xlu0.b32.cont [11/16] 0.0, 128
        %857 = vxpose.xlu0.b32.cont [12/16] 0.0, 128
        %858 = vxpose.xlu0.b32.cont [13/16] 0.0, 128
        %859 = vxpose.xlu0.b32.cont [14/16] 0.0, 128
        %860 = vxpose.xlu0.b32.cont [15/16] 0.0, 128
        %861 = vxpose.xlu0.b32.end [16/16] 0.0, 128
        %v862 = vpop.trf.xlu0
        %v863 = vpop.trf.xlu0
        %v864 = vpop.trf.xlu0
        %v865 = vpop.trf.xlu0
        %v866 = vpop.trf.xlu0
        %v867 = vpop.trf.xlu0
        %v868 = vpop.trf.xlu0
        %v869 = vpop.trf.xlu0
        %v870 = vpop.trf.xlu0
        %v871 = vpop.trf.xlu0
        %v872 = vpop.trf.xlu0
        %v873 = vpop.trf.xlu0
        %v874 = vpop.trf.xlu0
        %v875 = vpop.trf.xlu0
        %v876 = vpop.trf.xlu0
        %v877 = vpop.trf.xlu0
        %878 = vxpose.xlu0.b32.start [1/16] %v651, 128
        %879 = vxpose.xlu0.b32.cont [2/16] 0.0, 128
        %880 = vxpose.xlu0.b32.cont [3/16] 0.0, 128
        %881 = vxpose.xlu0.b32.cont [4/16] 0.0, 128
        %882 = vxpose.xlu0.b32.cont [5/16] 0.0, 128
        %883 = vxpose.xlu0.b32.cont [6/16] 0.0, 128
        %884 = vxpose.xlu0.b32.cont [7/16] 0.0, 128
        %885 = vxpose.xlu0.b32.cont [8/16] 0.0, 128
        %886 = vxpose.xlu0.b32.cont [9/16] 0.0, 128
        %887 = vxpose.xlu0.b32.cont [10/16] 0.0, 128
        %888 = vxpose.xlu0.b32.cont [11/16] 0.0, 128
        %889 = vxpose.xlu0.b32.cont [12/16] 0.0, 128
        %890 = vxpose.xlu0.b32.cont [13/16] 0.0, 128
        %891 = vxpose.xlu0.b32.cont [14/16] 0.0, 128
        %892 = vxpose.xlu0.b32.cont [15/16] 0.0, 128
        %893 = vxpose.xlu0.b32.end [16/16] 0.0, 128
        %v894 = vpop.trf.xlu0
        %v895 = vpop.trf.xlu0
        %v896 = vpop.trf.xlu0
        %v897 = vpop.trf.xlu0
        %v898 = vpop.trf.xlu0
        %v899 = vpop.trf.xlu0
        %v900 = vpop.trf.xlu0
        %v901 = vpop.trf.xlu0
        %v902 = vpop.trf.xlu0
        %v903 = vpop.trf.xlu0
        %v904 = vpop.trf.xlu0
        %v905 = vpop.trf.xlu0
        %v906 = vpop.trf.xlu0
        %v907 = vpop.trf.xlu0
        %v908 = vpop.trf.xlu0
        %v909 = vpop.trf.xlu0
        %v910 = vcombine.low %v670, %v734
        %v912 = vunpack.c.l.s4 1983009808
        %v913 = vunpack.c.0.s8 %v912
        %v914 = vlaneseq
        %v915 = vshrl.u32 %v914, 7
        %v916 = vsub.s32 %v913, %v915
        %v917 = vrot.slane %v910, %v916
        %v918 = vcombine.low %v702, %v766
        %v920 = vunpack.c.l.s4 1983009808
        %v921 = vunpack.c.0.s8 %v920
        %v922 = vlaneseq
        %v923 = vshrl.u32 %v922, 7
        %v924 = vsub.s32 %v921, %v923
        %v925 = vrot.slane %v918, %v924
        %v926 = vcombine.low %v798, %v862
        %v928 = vunpack.c.l.s4 1983009808
        %v929 = vunpack.c.0.s8 %v928
        %v930 = vlaneseq
        %v931 = vshrl.u32 %v930, 7
        %v932 = vsub.s32 %v929, %v931
        %v933 = vrot.slane %v926, %v932
        %v934 = vcombine.low %v830, %v894
        %v936 = vunpack.c.l.s4 1983009808
        %v937 = vunpack.c.0.s8 %v936
        %v938 = vlaneseq
        %v939 = vshrl.u32 %v938, 7
        %v940 = vsub.s32 %v937, %v939
        %v941 = vrot.slane %v934, %v940
        %v942 = vcombine.low %v917, %v925
        %v943 = vcombine.high %v917, %v925
        %v945 = vunpack.c.l.s4 1934713408
        %v946 = vunpack.c.0.s8 %v945
        %v947 = vlaneseq
        %v948 = vshrl.u32 %v947, 7
        %v949 = vsub.s32 %v946, %v948
        %v950 = vrot.slane %v942, %v949
        %v952 = vunpack.c.l.s4 1934713408
        %v953 = vunpack.c.0.s8 %v952
        %v954 = vlaneseq
        %v955 = vshrl.u32 %v954, 7
        %v956 = vsub.s32 %v953, %v955
        %v957 = vrot.slane %v943, %v956
        %v958 = vcombine.low %v933, %v941
        %v959 = vcombine.high %v933, %v941
        %v961 = vunpack.c.l.s4 1934713408
        %v962 = vunpack.c.0.s8 %v961
        %v963 = vlaneseq
        %v964 = vshrl.u32 %v963, 7
        %v965 = vsub.s32 %v962, %v964
        %v966 = vrot.slane %v958, %v965
        %v968 = vunpack.c.l.s4 1934713408
        %v969 = vunpack.c.0.s8 %v968
        %v970 = vlaneseq
        %v971 = vshrl.u32 %v970, 7
        %v972 = vsub.s32 %v969, %v971
        %v973 = vrot.slane %v959, %v972
        %v974 = vcombine.low %v950, %v966
        %v975 = vcombine.high %v950, %v966
        %v976 = vcombine.low %v957, %v973
        %v977 = vcombine.high %v957, %v973
        %v978 = vlaneseq
        %v979 = vshrl.u32 %v978, 7
        %v980 = vsub.s32 0, %v979
        %v981 = vrot.slane %v497, %v980
        %983 = vbcast.lane.b32.xlu0 %v981, 256
        %v984 = vpop.permute.xlu0 %983
        %v985 = vlaneseq
        %v986 = vshrl.u32 %v985, 7
        %v987 = vsub.s32 1, %v986
        %v988 = vrot.slane %v497, %v987
        %990 = vbcast.lane.b32.xlu0 %v988, 256
        %v991 = vpop.permute.xlu0 %990
        %v992 = vlaneseq
        %v993 = vshrl.u32 %v992, 7
        %v994 = vsub.s32 2, %v993
        %v995 = vrot.slane %v497, %v994
        %997 = vbcast.lane.b32.xlu0 %v995, 256
        %v998 = vpop.permute.xlu0 %997
        %v999 = vlaneseq
        %v1000 = vshrl.u32 %v999, 7
        %v1001 = vsub.s32 3, %v1000
        %v1002 = vrot.slane %v497, %v1001
        %1004 = vbcast.lane.b32.xlu0 %v1002, 256
        %v1005 = vpop.permute.xlu0 %1004
        %v1007 = vcombine.high %v497, %v497
        %v1009 = vunpack.c.l.s4 1966171168
        %v1010 = vunpack.c.0.s8 %v1009
        %v1011 = vlaneseq
        %v1012 = vshrl.u32 %v1011, 7
        %v1013 = vsub.s32 %v1010, %v1012
        %v1014 = vrot.slane %v1007, %v1013
        %v1015 = vcombine.high %v1014, %v1014
        %v1017 = vunpack.c.l.s4 1966171168
        %v1018 = vunpack.c.0.s8 %v1017
        %v1019 = vlaneseq
        %v1020 = vshrl.u32 %v1019, 7
        %v1021 = vsub.s32 %v1018, %v1020
        %v1022 = vrot.slane %v1014, %v1021
        %v1024 = vunpack.c.l.s4 1966171168
        %v1025 = vunpack.c.0.s8 %v1024
        %v1026 = vlaneseq
        %v1027 = vshrl.u32 %v1026, 7
        %v1028 = vsub.s32 %v1025, %v1027
        %v1029 = vrot.slane %v1015, %v1028
        %v1030 = vcombine.high %v1022, %v1022
        %v1031 = vcombine.high %v1029, %v1029
        %v1032 = vlaneseq
        %v1033 = vshrl.u32 %v1032, 7
        %v1034 = vsub.s32 0, %v1033
        %v1035 = vrot.slane %v1022, %v1034
        %v1036 = vlaneseq
        %v1037 = vshrl.u32 %v1036, 7
        %v1038 = vsub.s32 0, %v1037
        %v1039 = vrot.slane %v1029, %v1038
        %v1040 = vlaneseq
        %v1041 = vshrl.u32 %v1040, 7
        %v1042 = vsub.s32 0, %v1041
        %v1043 = vrot.slane %v1030, %v1042
        %v1044 = vlaneseq
        %v1045 = vshrl.u32 %v1044, 7
        %v1046 = vsub.s32 0, %v1045
        %v1047 = vrot.slane %v1031, %v1046
        %v1052 = vadd.f32 %v984, %v1035
        %v1053 = vadd.f32 %v991, %v1039
        %v1054 = vadd.f32 %v998, %v1043
        %v1055 = vadd.f32 %v1005, %v1047
        %v1056 = vadd.f32 %v1052, %v974
        %v1057 = vadd.f32 %v1053, %v975
        %v1058 = vadd.f32 %v1054, %v976
        %v1059 = vadd.f32 %v1055, %v977
        %vm1060 = vcmp.gt.f32.partialorder %v1056, 0.0
        %vm1061 = vcmp.gt.f32.partialorder %v1057, 0.0
        %vm1062 = vcmp.gt.f32.partialorder %v1058, 0.0
        %vm1063 = vcmp.gt.f32.partialorder %v1059, 0.0
        %v1064 = vmul.f32 %v1056, 0.2
        %v1065 = vmul.f32 %v1057, 0.2
        %v1066 = vmul.f32 %v1058, 0.2
        %v1067 = vmul.f32 %v1059, 0.2
        %v1068 = vsel %vm1060, %v1056, %v1064
        %v1069 = vsel %vm1061, %v1057, %v1065
        %v1070 = vsel %vm1062, %v1058, %v1066
        %v1071 = vsel %vm1063, %v1059, %v1067
        %v1072 = vld [vmem:[%s324] sm:$0xff]
        %v1073 = vadd.f32 %v1068, %v1072
        %v1074 = vadd.f32 %v1069, %v1072
        %v1075 = vadd.f32 %v1070, %v1072
        %v1076 = vadd.f32 %v1071, %v1072
        %vm1077 = vcmask 64512
        %v1078 = vsel %vm1077, %v1073, -inf
        %1079 = vmax.xlane.f32.xlu0 %v1078
        %v1080 = vpop.xlane.xlu0 %1079
        %v1081 = vsel %vm1077, %v1074, -inf
        %1082 = vmax.xlane.f32.xlu0 %v1081
        %v1083 = vpop.xlane.xlu0 %1082
        %v1084 = vsel %vm1077, %v1075, -inf
        %1085 = vmax.xlane.f32.xlu0 %v1084
        %v1086 = vpop.xlane.xlu0 %1085
        %v1087 = vsel %vm1077, %v1076, -inf
        %1088 = vmax.xlane.f32.xlu0 %v1087
        %v1089 = vpop.xlane.xlu0 %1088
        %v1090 = vsub.f32 %v1073, %v1080
        %v1091 = vsub.f32 %v1074, %v1083
        %v1092 = vsub.f32 %v1075, %v1086
        %v1093 = vsub.f32 %v1076, %v1089
        %v1094 = vmul.f32 %v1090, 1.442695
        %v1095 = vpow.pop %v1094
        %v1096 = vmul.f32 %v1091, 1.442695
        %v1097 = vpow.pop %v1096
        %v1098 = vmul.f32 %v1092, 1.442695
        %v1099 = vpow.pop %v1098
        %v1100 = vmul.f32 %v1093, 1.442695
        %v1101 = vpow.pop %v1100
        %v1102 = vsel %vm1077, %v1095, 0.0
        %1103 = vadd.xlane.f32.xlu0 %v1102
        %v1104 = vpop.xlane.xlu0 %1103
        %v1105 = vsel %vm1077, %v1097, 0.0
        %1106 = vadd.xlane.f32.xlu0 %v1105
        %v1107 = vpop.xlane.xlu0 %1106
        %v1108 = vsel %vm1077, %v1099, 0.0
        %1109 = vadd.xlane.f32.xlu0 %v1108
        %v1110 = vpop.xlane.xlu0 %1109
        %v1111 = vsel %vm1077, %v1101, 0.0
        %1112 = vadd.xlane.f32.xlu0 %v1111
        %v1113 = vpop.xlane.xlu0 %1112
        %v1114 = vrcp.pop %v1104
        %v1115 = vmul.f32 %v1095, %v1114
        %v1116 = vrcp.pop %v1107
        %v1117 = vmul.f32 %v1097, %v1116
        %v1118 = vrcp.pop %v1110
        %v1119 = vmul.f32 %v1099, %v1118
        %v1120 = vrcp.pop %v1113
        %v1121 = vmul.f32 %v1101, %v1120
        %1122 = vrot.lane.b32.xlu0 %v401, 120
        %v1123 = vpop.permute.xlu0 %1122
        %1125 = vrot.lane.b32.xlu0 %v401, 112
        %v1126 = vpop.permute.xlu0 %1125
        %1128 = vrot.lane.b32.xlu0 %v401, 104
        %v1129 = vpop.permute.xlu0 %1128
        %v1131 = vcombine.low %v401, %v1126
        %v1132 = vcombine.high %v401, %v1126
        %v1134 = vunpack.c.l.s4 1983009808
        %v1135 = vunpack.c.0.s8 %v1134
        %v1136 = vlaneseq
        %v1137 = vshrl.u32 %v1136, 7
        %v1138 = vsub.s32 %v1135, %v1137
        %v1139 = vrot.slane %v1131, %v1138
        %v1141 = vunpack.c.l.s4 1983009808
        %v1142 = vunpack.c.0.s8 %v1141
        %v1143 = vlaneseq
        %v1144 = vshrl.u32 %v1143, 7
        %v1145 = vsub.s32 %v1142, %v1144
        %v1146 = vrot.slane %v1132, %v1145
        %v1147 = vcombine.low %v1123, %v1129
        %v1148 = vcombine.high %v1123, %v1129
        %v1150 = vunpack.c.l.s4 1983009808
        %v1151 = vunpack.c.0.s8 %v1150
        %v1152 = vlaneseq
        %v1153 = vshrl.u32 %v1152, 7
        %v1154 = vsub.s32 %v1151, %v1153
        %v1155 = vrot.slane %v1147, %v1154
        %v1157 = vunpack.c.l.s4 1983009808
        %v1158 = vunpack.c.0.s8 %v1157
        %v1159 = vlaneseq
        %v1160 = vshrl.u32 %v1159, 7
        %v1161 = vsub.s32 %v1158, %v1160
        %v1162 = vrot.slane %v1148, %v1161
        %v1163 = vcombine.low %v1139, %v1155
        %v1164 = vcombine.high %v1139, %v1155
        %v1166 = vunpack.c.l.s4 1934713408
        %v1167 = vunpack.c.0.s8 %v1166
        %v1168 = vlaneseq
        %v1169 = vshrl.u32 %v1168, 7
        %v1170 = vsub.s32 %v1167, %v1169
        %v1171 = vrot.slane %v1163, %v1170
        %v1173 = vunpack.c.l.s4 1934713408
        %v1174 = vunpack.c.0.s8 %v1173
        %v1175 = vlaneseq
        %v1176 = vshrl.u32 %v1175, 7
        %v1177 = vsub.s32 %v1174, %v1176
        %v1178 = vrot.slane %v1164, %v1177
        %v1179 = vcombine.low %v1146, %v1162
        %v1180 = vcombine.high %v1146, %v1162
        %v1182 = vunpack.c.l.s4 1934713408
        %v1183 = vunpack.c.0.s8 %v1182
        %v1184 = vlaneseq
        %v1185 = vshrl.u32 %v1184, 7
        %v1186 = vsub.s32 %v1183, %v1185
        %v1187 = vrot.slane %v1179, %v1186
        %v1189 = vunpack.c.l.s4 1934713408
        %v1190 = vunpack.c.0.s8 %v1189
        %v1191 = vlaneseq
        %v1192 = vshrl.u32 %v1191, 7
        %v1193 = vsub.s32 %v1190, %v1192
        %v1194 = vrot.slane %v1180, %v1193
        %v1195 = vcombine.high %v1171, 0.0
        %v1196 = vcombine.high %v1178, 0.0
        %v1197 = vcombine.high %v1187, 0.0
        %v1198 = vcombine.high %v1194, 0.0
        %v1199 = vcombine.low %v1171, %v1178
        %v1201 = vunpack.c.l.s4 1983009808
        %v1202 = vunpack.c.0.s8 %v1201
        %v1203 = vlaneseq
        %v1204 = vshrl.u32 %v1203, 7
        %v1205 = vsub.s32 %v1202, %v1204
        %v1206 = vrot.slane %v1199, %v1205
        %v1207 = vcombine.low %v1195, %v1196
        %v1209 = vunpack.c.l.s4 1983009808
        %v1210 = vunpack.c.0.s8 %v1209
        %v1211 = vlaneseq
        %v1212 = vshrl.u32 %v1211, 7
        %v1213 = vsub.s32 %v1210, %v1212
        %v1214 = vrot.slane %v1207, %v1213
        %v1215 = vcombine.low %v1187, %v1194
        %v1217 = vunpack.c.l.s4 1983009808
        %v1218 = vunpack.c.0.s8 %v1217
        %v1219 = vlaneseq
        %v1220 = vshrl.u32 %v1219, 7
        %v1221 = vsub.s32 %v1218, %v1220
        %v1222 = vrot.slane %v1215, %v1221
        %v1223 = vcombine.low %v1197, %v1198
        %v1225 = vunpack.c.l.s4 1983009808
        %v1226 = vunpack.c.0.s8 %v1225
        %v1227 = vlaneseq
        %v1228 = vshrl.u32 %v1227, 7
        %v1229 = vsub.s32 %v1226, %v1228
        %v1230 = vrot.slane %v1223, %v1229
        %v1231 = vcombine.low %v1206, %v1214
        %v1232 = vcombine.high %v1206, %v1214
        %v1234 = vunpack.c.l.s4 1934713408
        %v1235 = vunpack.c.0.s8 %v1234
        %v1236 = vlaneseq
        %v1237 = vshrl.u32 %v1236, 7
        %v1238 = vsub.s32 %v1235, %v1237
        %v1239 = vrot.slane %v1231, %v1238
        %v1241 = vunpack.c.l.s4 1934713408
        %v1242 = vunpack.c.0.s8 %v1241
        %v1243 = vlaneseq
        %v1244 = vshrl.u32 %v1243, 7
        %v1245 = vsub.s32 %v1242, %v1244
        %v1246 = vrot.slane %v1232, %v1245
        %v1247 = vcombine.low %v1222, %v1230
        %v1248 = vcombine.high %v1222, %v1230
        %v1250 = vunpack.c.l.s4 1934713408
        %v1251 = vunpack.c.0.s8 %v1250
        %v1252 = vlaneseq
        %v1253 = vshrl.u32 %v1252, 7
        %v1254 = vsub.s32 %v1251, %v1253
        %v1255 = vrot.slane %v1247, %v1254
        %v1257 = vunpack.c.l.s4 1934713408
        %v1258 = vunpack.c.0.s8 %v1257
        %v1259 = vlaneseq
        %v1260 = vshrl.u32 %v1259, 7
        %v1261 = vsub.s32 %v1258, %v1260
        %v1262 = vrot.slane %v1248, %v1261
        %v1263 = vcombine.low %v1239, %v1255
        %v1264 = vcombine.high %v1239, %v1255
        %v1265 = vcombine.low %v1246, %v1262
        %v1266 = vcombine.high %v1246, %v1262
        %v1268 = vsel %vm1077, %v1115, 0
        %1270 = vmatprep.subr.mxu0 0.0
        %1271 = vmatpush1.msra.mxu0 %v1263
        %1272 = vmatprep.subr.mxu0 0.0
        %1273 = vmatpush1.msra.mxu0 0.0
        %1274 = vmatprep.subr.mxu0 0.0
        %1275 = vmatpush1.msra.mxu0 0.0
        %1276 = vmatprep.subr.mxu0 0.0
        %1277 = vmatpush1.msra.mxu0 0.0
        %1278 = vmatprep.subr.mxu0 0.0
        %1279 = vmatpush1.msra.mxu0 0.0
        %1280 = vmatprep.subr.mxu0 0.0
        %1281 = vmatpush1.msra.mxu0 0.0
        %1282 = vmatprep.subr.mxu0 0.0
        %1283 = vmatpush1.msra.mxu0 0.0
        %1284 = vmatprep.subr.mxu0 0.0
        %1285 = vmatpush1.msra.mxu0 0.0
        %1286 = vmatprep.subr.mxu0 0.0
        %1287 = vmatpush1.msra.mxu0 0.0
        %1288 = vmatprep.subr.mxu0 0.0
        %1289 = vmatpush1.msra.mxu0 0.0
        %1290 = vmatprep.subr.mxu0 0.0
        %1291 = vmatpush1.msra.mxu0 0.0
        %1292 = vmatprep.subr.mxu0 0.0
        %1293 = vmatpush1.msra.mxu0 0.0
        %1294 = vmatprep.subr.mxu0 0.0
        %1295 = vmatpush1.msra.mxu0 0.0
        %1296 = vmatprep.subr.mxu0 0.0
        %1297 = vmatpush1.msra.mxu0 0.0
        %1298 = vmatprep.subr.mxu0 0.0
        %1299 = vmatpush1.msra.mxu0 0.0
        %1300 = vmatprep.subr.mxu0 0.0
        %1301 = vmatpush1.msra.mxu0 0.0
        %1302 = vmatprep.subr.mxu0 0.0
        %1303 = vmatpush1.msra.mxu0 0.0
        %1304 = vmatprep.subr.mxu0 0.0
        %1305 = vmatpush1.msra.mxu0 0.0
        %1306 = vmatprep.subr.mxu0 0.0
        %1307 = vmatpush1.msra.mxu0 0.0
        %1308 = vmatprep.subr.mxu0 0.0
        %1309 = vmatpush1.msra.mxu0 0.0
        %1310 = vmatprep.subr.mxu0 0.0
        %1311 = vmatpush1.msra.mxu0 0.0
        %1312 = vmatprep.subr.mxu0 0.0
        %1313 = vmatpush1.msra.mxu0 0.0
        %1314 = vmatprep.subr.mxu0 0.0
        %1315 = vmatpush1.msra.mxu0 0.0
        %1316 = vmatprep.subr.mxu0 0.0
        %1317 = vmatpush1.msra.mxu0 0.0
        %1318 = vmatprep.subr.mxu0 0.0
        %1319 = vmatpush1.msra.mxu0 0.0
        %1320 = vmatprep.subr.mxu0 0.0
        %1321 = vmatpush1.msra.mxu0 0.0
        %1322 = vmatprep.subr.mxu0 0.0
        %1323 = vmatpush1.msra.mxu0 0.0
        %1324 = vmatprep.subr.mxu0 0.0
        %1325 = vmatpush1.msra.mxu0 0.0
        %1326 = vmatprep.subr.mxu0 0.0
        %1327 = vmatpush1.msra.mxu0 0.0
        %1328 = vmatprep.subr.mxu0 0.0
        %1329 = vmatpush1.msra.mxu0 0.0
        %1330 = vmatprep.subr.mxu0 0.0
        %1331 = vmatpush1.msra.mxu0 0.0
        %1332 = vmatprep.subr.mxu0 0.0
        %1333 = vmatpush1.msra.mxu0 0.0
        %1334 = vmatprep.mubr.f32.mxu0 0.0
        %1335 = vmatmul.mubr.f32.gmra.mrb[0].mxu0 %v1268
        %v1336 = vpop.f32.mrb[0].mxu0
        %v1337 = vadd.f32 0.0, %v1336
        %v1338 = vpop.f32.mrb[0].mxu0
        %1339 = vdwg.mxu0
        %v1341 = vsel %vm1077, %v1117, 0
        %1343 = vmatprep.subr.mxu0 0.0
        %1344 = vmatpush1.msra.mxu0 %v1264
        %1345 = vmatprep.subr.mxu0 0.0
        %1346 = vmatpush1.msra.mxu0 0.0
        %1347 = vmatprep.subr.mxu0 0.0
        %1348 = vmatpush1.msra.mxu0 0.0
        %1349 = vmatprep.subr.mxu0 0.0
        %1350 = vmatpush1.msra.mxu0 0.0
        %1351 = vmatprep.subr.mxu0 0.0
        %1352 = vmatpush1.msra.mxu0 0.0
        %1353 = vmatprep.subr.mxu0 0.0
        %1354 = vmatpush1.msra.mxu0 0.0
        %1355 = vmatprep.subr.mxu0 0.0
        %1356 = vmatpush1.msra.mxu0 0.0
        %1357 = vmatprep.subr.mxu0 0.0
        %1358 = vmatpush1.msra.mxu0 0.0
        %1359 = vmatprep.subr.mxu0 0.0
        %1360 = vmatpush1.msra.mxu0 0.0
        %1361 = vmatprep.subr.mxu0 0.0
        %1362 = vmatpush1.msra.mxu0 0.0
        %1363 = vmatprep.subr.mxu0 0.0
        %1364 = vmatpush1.msra.mxu0 0.0
        %1365 = vmatprep.subr.mxu0 0.0
        %1366 = vmatpush1.msra.mxu0 0.0
        %1367 = vmatprep.subr.mxu0 0.0
        %1368 = vmatpush1.msra.mxu0 0.0
        %1369 = vmatprep.subr.mxu0 0.0
        %1370 = vmatpush1.msra.mxu0 0.0
        %1371 = vmatprep.subr.mxu0 0.0
        %1372 = vmatpush1.msra.mxu0 0.0
        %1373 = vmatprep.subr.mxu0 0.0
        %1374 = vmatpush1.msra.mxu0 0.0
        %1375 = vmatprep.subr.mxu0 0.0
        %1376 = vmatpush1.msra.mxu0 0.0
        %1377 = vmatprep.subr.mxu0 0.0
        %1378 = vmatpush1.msra.mxu0 0.0
        %1379 = vmatprep.subr.mxu0 0.0
        %1380 = vmatpush1.msra.mxu0 0.0
        %1381 = vmatprep.subr.mxu0 0.0
        %1382 = vmatpush1.msra.mxu0 0.0
        %1383 = vmatprep.subr.mxu0 0.0
        %1384 = vmatpush1.msra.mxu0 0.0
        %1385 = vmatprep.subr.mxu0 0.0
        %1386 = vmatpush1.msra.mxu0 0.0
        %1387 = vmatprep.subr.mxu0 0.0
        %1388 = vmatpush1.msra.mxu0 0.0
        %1389 = vmatprep.subr.mxu0 0.0
        %1390 = vmatpush1.msra.mxu0 0.0
        %1391 = vmatprep.subr.mxu0 0.0
        %1392 = vmatpush1.msra.mxu0 0.0
        %1393 = vmatprep.subr.mxu0 0.0
        %1394 = vmatpush1.msra.mxu0 0.0
        %1395 = vmatprep.subr.mxu0 0.0
        %1396 = vmatpush1.msra.mxu0 0.0
        %1397 = vmatprep.subr.mxu0 0.0
        %1398 = vmatpush1.msra.mxu0 0.0
        %1399 = vmatprep.subr.mxu0 0.0
        %1400 = vmatpush1.msra.mxu0 0.0
        %1401 = vmatprep.subr.mxu0 0.0
        %1402 = vmatpush1.msra.mxu0 0.0
        %1403 = vmatprep.subr.mxu0 0.0
        %1404 = vmatpush1.msra.mxu0 0.0
        %1405 = vmatprep.subr.mxu0 0.0
        %1406 = vmatpush1.msra.mxu0 0.0
        %1407 = vmatprep.mubr.f32.mxu0 0.0
        %1408 = vmatmul.mubr.f32.gmra.mrb[0].mxu0 %v1341
        %v1409 = vpop.f32.mrb[0].mxu0
        %v1410 = vadd.f32 0.0, %v1409
        %v1411 = vpop.f32.mrb[0].mxu0
        %1412 = vdwg.mxu0
        %v1414 = vsel %vm1077, %v1119, 0
        %1416 = vmatprep.subr.mxu0 0.0
        %1417 = vmatpush1.msra.mxu0 %v1265
        %1418 = vmatprep.subr.mxu0 0.0
        %1419 = vmatpush1.msra.mxu0 0.0
        %1420 = vmatprep.subr.mxu0 0.0
        %1421 = vmatpush1.msra.mxu0 0.0
        %1422 = vmatprep.subr.mxu0 0.0
        %1423 = vmatpush1.msra.mxu0 0.0
        %1424 = vmatprep.subr.mxu0 0.0
        %1425 = vmatpush1.msra.mxu0 0.0
        %1426 = vmatprep.subr.mxu0 0.0
        %1427 = vmatpush1.msra.mxu0 0.0
        %1428 = vmatprep.subr.mxu0 0.0
        %1429 = vmatpush1.msra.mxu0 0.0
        %1430 = vmatprep.subr.mxu0 0.0
        %1431 = vmatpush1.msra.mxu0 0.0
        %1432 = vmatprep.subr.mxu0 0.0
        %1433 = vmatpush1.msra.mxu0 0.0
        %1434 = vmatprep.subr.mxu0 0.0
        %1435 = vmatpush1.msra.mxu0 0.0
        %1436 = vmatprep.subr.mxu0 0.0
        %1437 = vmatpush1.msra.mxu0 0.0
        %1438 = vmatprep.subr.mxu0 0.0
        %1439 = vmatpush1.msra.mxu0 0.0
        %1440 = vmatprep.subr.mxu0 0.0
        %1441 = vmatpush1.msra.mxu0 0.0
        %1442 = vmatprep.subr.mxu0 0.0
        %1443 = vmatpush1.msra.mxu0 0.0
        %1444 = vmatprep.subr.mxu0 0.0
        %1445 = vmatpush1.msra.mxu0 0.0
        %1446 = vmatprep.subr.mxu0 0.0
        %1447 = vmatpush1.msra.mxu0 0.0
        %1448 = vmatprep.subr.mxu0 0.0
        %1449 = vmatpush1.msra.mxu0 0.0
        %1450 = vmatprep.subr.mxu0 0.0
        %1451 = vmatpush1.msra.mxu0 0.0
        %1452 = vmatprep.subr.mxu0 0.0
        %1453 = vmatpush1.msra.mxu0 0.0
        %1454 = vmatprep.subr.mxu0 0.0
        %1455 = vmatpush1.msra.mxu0 0.0
        %1456 = vmatprep.subr.mxu0 0.0
        %1457 = vmatpush1.msra.mxu0 0.0
        %1458 = vmatprep.subr.mxu0 0.0
        %1459 = vmatpush1.msra.mxu0 0.0
        %1460 = vmatprep.subr.mxu0 0.0
        %1461 = vmatpush1.msra.mxu0 0.0
        %1462 = vmatprep.subr.mxu0 0.0
        %1463 = vmatpush1.msra.mxu0 0.0
        %1464 = vmatprep.subr.mxu0 0.0
        %1465 = vmatpush1.msra.mxu0 0.0
        %1466 = vmatprep.subr.mxu0 0.0
        %1467 = vmatpush1.msra.mxu0 0.0
        %1468 = vmatprep.subr.mxu0 0.0
        %1469 = vmatpush1.msra.mxu0 0.0
        %1470 = vmatprep.subr.mxu0 0.0
        %1471 = vmatpush1.msra.mxu0 0.0
        %1472 = vmatprep.subr.mxu0 0.0
        %1473 = vmatpush1.msra.mxu0 0.0
        %1474 = vmatprep.subr.mxu0 0.0
        %1475 = vmatpush1.msra.mxu0 0.0
        %1476 = vmatprep.subr.mxu0 0.0
        %1477 = vmatpush1.msra.mxu0 0.0
        %1478 = vmatprep.subr.mxu0 0.0
        %1479 = vmatpush1.msra.mxu0 0.0
        %1480 = vmatprep.mubr.f32.mxu0 0.0
        %1481 = vmatmul.mubr.f32.gmra.mrb[0].mxu0 %v1414
        %v1482 = vpop.f32.mrb[0].mxu0
        %v1483 = vadd.f32 0.0, %v1482
        %v1484 = vpop.f32.mrb[0].mxu0
        %1485 = vdwg.mxu0
        %v1487 = vsel %vm1077, %v1121, 0
        %1489 = vmatprep.subr.mxu0 0.0
        %1490 = vmatpush1.msra.mxu0 %v1266
        %1491 = vmatprep.subr.mxu0 0.0
        %1492 = vmatpush1.msra.mxu0 0.0
        %1493 = vmatprep.subr.mxu0 0.0
        %1494 = vmatpush1.msra.mxu0 0.0
        %1495 = vmatprep.subr.mxu0 0.0
        %1496 = vmatpush1.msra.mxu0 0.0
        %1497 = vmatprep.subr.mxu0 0.0
        %1498 = vmatpush1.msra.mxu0 0.0
        %1499 = vmatprep.subr.mxu0 0.0
        %1500 = vmatpush1.msra.mxu0 0.0
        %1501 = vmatprep.subr.mxu0 0.0
        %1502 = vmatpush1.msra.mxu0 0.0
        %1503 = vmatprep.subr.mxu0 0.0
        %1504 = vmatpush1.msra.mxu0 0.0
        %1505 = vmatprep.subr.mxu0 0.0
        %1506 = vmatpush1.msra.mxu0 0.0
        %1507 = vmatprep.subr.mxu0 0.0
        %1508 = vmatpush1.msra.mxu0 0.0
        %1509 = vmatprep.subr.mxu0 0.0
        %1510 = vmatpush1.msra.mxu0 0.0
        %1511 = vmatprep.subr.mxu0 0.0
        %1512 = vmatpush1.msra.mxu0 0.0
        %1513 = vmatprep.subr.mxu0 0.0
        %1514 = vmatpush1.msra.mxu0 0.0
        %1515 = vmatprep.subr.mxu0 0.0
        %1516 = vmatpush1.msra.mxu0 0.0
        %1517 = vmatprep.subr.mxu0 0.0
        %1518 = vmatpush1.msra.mxu0 0.0
        %1519 = vmatprep.subr.mxu0 0.0
        %1520 = vmatpush1.msra.mxu0 0.0
        %1521 = vmatprep.subr.mxu0 0.0
        %1522 = vmatpush1.msra.mxu0 0.0
        %1523 = vmatprep.subr.mxu0 0.0
        %1524 = vmatpush1.msra.mxu0 0.0
        %1525 = vmatprep.subr.mxu0 0.0
        %1526 = vmatpush1.msra.mxu0 0.0
        %1527 = vmatprep.subr.mxu0 0.0
        %1528 = vmatpush1.msra.mxu0 0.0
        %1529 = vmatprep.subr.mxu0 0.0
        %1530 = vmatpush1.msra.mxu0 0.0
        %1531 = vmatprep.subr.mxu0 0.0
        %1532 = vmatpush1.msra.mxu0 0.0
        %1533 = vmatprep.subr.mxu0 0.0
        %1534 = vmatpush1.msra.mxu0 0.0
        %1535 = vmatprep.subr.mxu0 0.0
        %1536 = vmatpush1.msra.mxu0 0.0
        %1537 = vmatprep.subr.mxu0 0.0
        %1538 = vmatpush1.msra.mxu0 0.0
        %1539 = vmatprep.subr.mxu0 0.0
        %1540 = vmatpush1.msra.mxu0 0.0
        %1541 = vmatprep.subr.mxu0 0.0
        %1542 = vmatpush1.msra.mxu0 0.0
        %1543 = vmatprep.subr.mxu0 0.0
        %1544 = vmatpush1.msra.mxu0 0.0
        %1545 = vmatprep.subr.mxu0 0.0
        %1546 = vmatpush1.msra.mxu0 0.0
        %1547 = vmatprep.subr.mxu0 0.0
        %1548 = vmatpush1.msra.mxu0 0.0
        %1549 = vmatprep.subr.mxu0 0.0
        %1550 = vmatpush1.msra.mxu0 0.0
        %1551 = vmatprep.subr.mxu0 0.0
        %1552 = vmatpush1.msra.mxu0 0.0
        %1553 = vmatprep.mubr.f32.mxu0 0.0
        %1554 = vmatmul.mubr.f32.gmra.mrb[0].mxu0 %v1487
        %v1555 = vpop.f32.mrb[0].mxu0
        %v1556 = vadd.f32 0.0, %v1555
        %v1557 = vpop.f32.mrb[0].mxu0
        %1558 = vdwg.mxu0
        %v1559 = vcombine.low %v1337, %v1483
        %v1560 = vcombine.high %v1337, %v1483
        %v1562 = vunpack.c.l.s4 1983009808
        %v1563 = vunpack.c.0.s8 %v1562
        %v1564 = vlaneseq
        %v1565 = vshrl.u32 %v1564, 7
        %v1566 = vsub.s32 %v1563, %v1565
        %v1567 = vrot.slane %v1559, %v1566
        %v1569 = vunpack.c.l.s4 1983009808
        %v1570 = vunpack.c.0.s8 %v1569
        %v1571 = vlaneseq
        %v1572 = vshrl.u32 %v1571, 7
        %v1573 = vsub.s32 %v1570, %v1572
        %v1574 = vrot.slane %v1560, %v1573
        %v1575 = vcombine.low %v1410, %v1556
        %v1576 = vcombine.high %v1410, %v1556
        %v1578 = vunpack.c.l.s4 1983009808
        %v1579 = vunpack.c.0.s8 %v1578
        %v1580 = vlaneseq
        %v1581 = vshrl.u32 %v1580, 7
        %v1582 = vsub.s32 %v1579, %v1581
        %v1583 = vrot.slane %v1575, %v1582
        %v1585 = vunpack.c.l.s4 1983009808
        %v1586 = vunpack.c.0.s8 %v1585
        %v1587 = vlaneseq
        %v1588 = vshrl.u32 %v1587, 7
        %v1589 = vsub.s32 %v1586, %v1588
        %v1590 = vrot.slane %v1576, %v1589
        %v1591 = vcombine.low %v1567, %v1583
        %v1592 = vcombine.high %v1567, %v1583
        %v1594 = vunpack.c.l.s4 1934713408
        %v1595 = vunpack.c.0.s8 %v1594
        %v1596 = vlaneseq
        %v1597 = vshrl.u32 %v1596, 7
        %v1598 = vsub.s32 %v1595, %v1597
        %v1599 = vrot.slane %v1591, %v1598
        %v1601 = vunpack.c.l.s4 1934713408
        %v1602 = vunpack.c.0.s8 %v1601
        %v1603 = vlaneseq
        %v1604 = vshrl.u32 %v1603, 7
        %v1605 = vsub.s32 %v1602, %v1604
        %v1606 = vrot.slane %v1592, %v1605
        %v1607 = vcombine.low %v1574, %v1590
        %v1608 = vcombine.high %v1574, %v1590
        %v1610 = vunpack.c.l.s4 1934713408
        %v1611 = vunpack.c.0.s8 %v1610
        %v1612 = vlaneseq
        %v1613 = vshrl.u32 %v1612, 7
        %v1614 = vsub.s32 %v1611, %v1613
        %v1615 = vrot.slane %v1607, %v1614
        %v1617 = vunpack.c.l.s4 1934713408
        %v1618 = vunpack.c.0.s8 %v1617
        %v1619 = vlaneseq
        %v1620 = vshrl.u32 %v1619, 7
        %v1621 = vsub.s32 %v1618, %v1620
        %v1622 = vrot.slane %v1608, %v1621
        %v1623 = vcombine.high %v1599, 0.0
        %v1624 = vcombine.high %v1606, 0.0
        %v1625 = vcombine.high %v1615, 0.0
        %v1626 = vcombine.high %v1622, 0.0
        %v1627 = vcombine.low %v1599, %v1606
        %v1629 = vunpack.c.l.s4 1983009808
        %v1630 = vunpack.c.0.s8 %v1629
        %v1631 = vlaneseq
        %v1632 = vshrl.u32 %v1631, 7
        %v1633 = vsub.s32 %v1630, %v1632
        %v1634 = vrot.slane %v1627, %v1633
        %v1635 = vcombine.low %v1623, %v1624
        %v1637 = vunpack.c.l.s4 1983009808
        %v1638 = vunpack.c.0.s8 %v1637
        %v1639 = vlaneseq
        %v1640 = vshrl.u32 %v1639, 7
        %v1641 = vsub.s32 %v1638, %v1640
        %v1642 = vrot.slane %v1635, %v1641
        %v1643 = vcombine.low %v1615, %v1622
        %v1645 = vunpack.c.l.s4 1983009808
        %v1646 = vunpack.c.0.s8 %v1645
        %v1647 = vlaneseq
        %v1648 = vshrl.u32 %v1647, 7
        %v1649 = vsub.s32 %v1646, %v1648
        %v1650 = vrot.slane %v1643, %v1649
        %v1651 = vcombine.low %v1625, %v1626
        %v1653 = vunpack.c.l.s4 1983009808
        %v1654 = vunpack.c.0.s8 %v1653
        %v1655 = vlaneseq
        %v1656 = vshrl.u32 %v1655, 7
        %v1657 = vsub.s32 %v1654, %v1656
        %v1658 = vrot.slane %v1651, %v1657
        %v1659 = vcombine.low %v1634, %v1642
        %v1660 = vcombine.high %v1634, %v1642
        %v1662 = vunpack.c.l.s4 1934713408
        %v1663 = vunpack.c.0.s8 %v1662
        %v1664 = vlaneseq
        %v1665 = vshrl.u32 %v1664, 7
        %v1666 = vsub.s32 %v1663, %v1665
        %v1667 = vrot.slane %v1659, %v1666
        %v1669 = vunpack.c.l.s4 1934713408
        %v1670 = vunpack.c.0.s8 %v1669
        %v1671 = vlaneseq
        %v1672 = vshrl.u32 %v1671, 7
        %v1673 = vsub.s32 %v1670, %v1672
        %v1674 = vrot.slane %v1660, %v1673
        %v1675 = vcombine.low %v1650, %v1658
        %v1676 = vcombine.high %v1650, %v1658
        %v1678 = vunpack.c.l.s4 1934713408
        %v1679 = vunpack.c.0.s8 %v1678
        %v1680 = vlaneseq
        %v1681 = vshrl.u32 %v1680, 7
        %v1682 = vsub.s32 %v1679, %v1681
        %v1683 = vrot.slane %v1675, %v1682
        %v1685 = vunpack.c.l.s4 1934713408
        %v1686 = vunpack.c.0.s8 %v1685
        %v1687 = vlaneseq
        %v1688 = vshrl.u32 %v1687, 7
        %v1689 = vsub.s32 %v1686, %v1688
        %v1690 = vrot.slane %v1676, %v1689
        %v1691 = vcombine.low %v1667, %v1683
        %v1692 = vcombine.high %v1667, %v1683
        %v1693 = vcombine.low %v1674, %v1690
        %v1694 = vcombine.high %v1674, %v1690
        %1696 = vrot.lane.b32.xlu0 %v1692, 8
        %v1697 = vpop.permute.xlu0 %1696
        %1700 = vrot.lane.b32.xlu0 %v1693, 16
        %v1701 = vpop.permute.xlu0 %1700
        %1704 = vrot.lane.b32.xlu0 %v1694, 24
        %v1705 = vpop.permute.xlu0 %1704
        %v1707 = vsel %vm1077, %v1691, %v1697
        %vm1708 = vcmask 130048
        %v1709 = vsel %vm1708, %v1707, %v1701
        %vm1710 = vcmask 195584
        %v1711 = vsel %vm1710, %v1709, %v1705
        %1712 = vst.msk [vmem:[%s303] sm:$0xff] %vm330, %v1711
        %s1713 = sand.u32 %s187, 1
        %s1714 = scalar_lea.sflag [#allocation3], %s1713
        %s1715 = sand.u32 %s187, 1
        %s1716 = smul.addr %s1715, 8
        %s1717 = scalar_lea.vmem [#allocation2], %s1716
        // Predicated region
        $region45: #{tpu_custom_call.1} parent=43 // pred_check
          %p1718 = pneg %p197
        $region46: #{tpu_custom_call.1} parent=43 // pred_check_branch
          %1720 = sbr.rel (%p1718) target = $region48
        $region47: #{tpu_custom_call.1} parent=43 // pred_region
          %s1722 = ssub.s32 128, 128
          %1723 = vsyncadd %s1714, %s1722
          %s1724 = sadd.s32 %s25, %s24
          %s1725 = smul.addr %s1724, 128
          %s1726 = scalar_lea.hbm %s6, %s1725
          %s1728 = sshll.u32 %s1717, 4
          %s1729 = int_to_ptr.vmem [resolvable:$true] %s1728
          %1731 = dma.vmem_to_hbm [thread:$0]  %s1729, 128, %s1726, %s1714
        $region48: #{tpu_custom_call.1} parent=43 // pred_fallthru
          _
      $region44: #{tpu_custom_call.1} parent=5 // pred_fallthru
        _
      %p1732 = scmp.le.s32.totalorder 2, %s15
      // Predicated region
      $region49: #{tpu_custom_call.1} parent=5 // pred_check
        %p1733 = pneg %p1732
      $region50: #{tpu_custom_call.1} parent=5 // pred_check_branch
        %1735 = sbr.rel (%p1733) target = $region52
      $region51: #{tpu_custom_call.1} parent=5 // pred_region
        %s1736 = ssub.s32 %s15, 2
        // Predicated region
        $region53: #{tpu_custom_call.1} parent=51 // pred_check
          %p1737 = pneg %p203
        $region54: #{tpu_custom_call.1} parent=51 // pred_check_branch
          %1739 = sbr.rel (%p1737) target = $region56
        $region55: #{tpu_custom_call.1} parent=51 // pred_region
          %s1740 = sand.u32 %s188, 1
          %s1741 = scalar_lea.sflag [#allocation3], %s1740
          %s1742 = sand.u32 %s188, 1
          %s1743 = smul.addr %s1742, 8
          %s1744 = scalar_lea.vmem [#allocation2], %s1743
          %1745 = dma.done %s1741, 128
        $region56: #{tpu_custom_call.1} parent=51 // pred_fallthru
          _
      $region52: #{tpu_custom_call.1} parent=5 // pred_fallthru
        _
    $region6: #{tpu_custom_call.1} parent=1 // loop_footer
      %s19 = sadd.s32 1, %s15
    $region7: #{tpu_custom_call.1} parent=1 // loop_footer_branch
      %14 = sbr.rel target = $region3
    $region8: #{tpu_custom_call.1} parent=1 // loop_exit
      _
    %1746 = vsyncpa [#allocation3], 1
    %s1747 = scalar_lea.sflag [#allocation3], 1
    %1748 = vsyncpa %s1747, 1

</llo_original>
